<compile_context>
chip_gen: v7x
topology: tpu7x:2x2x1
jax: 0.10.0
libtpu: 0.0.40
codegen_flags: <defaults>
</compile_context>

<pallas_src>
from functools import partial

import jax
import jax.numpy as jnp
from jax.experimental import pallas as pl
from jax.experimental.pallas import tpu as pltpu


def _round_up(n, m):
    return ((n + m - 1) // m) * m


def gated_attn_kernel(x_ref, wab_ref, bab_ref, wc_ref, bc_ref, A_ref,
                      *, D, vpu_tail):
    """Fused gated-attention head for one (tile_n, L) batch tile.

    x_ref   : (tile_n, L)  input dtype (f32) -- cast to bf16 here
    wab_ref : (L, 2D)      bf16   -- [Wa | Wb] fused
    bab_ref : (1, 2D)      f32    -- [ba | bb]
    wc_ref  : (C, D) f32 if vpu_tail else (D, C) bf16
    bc_ref  : (1, C)       f32
    A_ref   : (tile_n, C)  f32
    """
    x = x_ref[...].astype(wab_ref.dtype)
    # Single MXU launch for both L->D projections; f32 accumulation.
    ab = jnp.dot(x, wab_ref[...], preferred_element_type=jnp.float32) + bab_ref[...]

    # Both branches through tanh: sigmoid(z) == 0.5*(tanh(z/2)+1) -> one EUP op
    # on the sigmoid branch instead of exp + reciprocal.  Activations stay f32
    # (v5e has no bf16 VPU/EUP path).
    a = jnp.tanh(ab[:, :D])                          # attention_a
    b = 0.5 * (jnp.tanh(0.5 * ab[:, D:]) + 1.0)      # attention_b (== sigmoid)
    gated = a * b                                    # (tile_n, D), f32

    if vpu_tail:
        # Tiny C: per-class broadcast-multiply + lane reduction (VPU/XLU);
        # avoids a 1..8-column MXU matmul.
        wct = wc_ref[...]                            # (C, D) f32
        C = wct.shape[0]
        cols = [jnp.sum(gated * wct[c:c + 1, :], axis=-1, keepdims=True)
                for c in range(C)]
        A = cols[0] if C == 1 else jnp.concatenate(cols, axis=-1)
        A = A + bc_ref[...]
    else:
        A = jnp.dot(gated.astype(wc_ref.dtype), wc_ref[...],
                    preferred_element_type=jnp.float32) + bc_ref[...]

    A_ref[...] = A.astype(A_ref.dtype)


def attn_net_gated(x, params, *, tile_n=1024, compute_dtype=jnp.bfloat16):
    """Pallas wrapper. x: (N, L). Returns (A, x) like the torch module.

    params: dict with wa (L, D), ba (D,), wb (L, D), bb (D,), wc (D, C), bc (C,)
    (weights stored as (in, out) = torch weight transposed).
    """
    N, L = x.shape
    D = params["wa"].shape[1]
    C = params["wc"].shape[1]

    # ---- parameter prep (tiny, wrapper-side) --------------------------------
    w_ab = jnp.concatenate([params["wa"], params["wb"]], axis=1).astype(compute_dtype)
    b_ab = jnp.concatenate([params["ba"], params["bb"]]).reshape(1, 2 * D).astype(jnp.float32)

    vpu_tail = C <= 8
    if vpu_tail:
        wc = params["wc"].T.astype(jnp.float32)          # (C, D), tiny, stays f32
        wc_block = (C, D)
    else:
        wc = params["wc"].astype(compute_dtype)          # (D, C)
        wc_block = (D, C)
    bc = params["bc"].reshape(1, C).astype(jnp.float32)

    # ---- batch tiling (x streamed as-is; ragged last tile handled by Pallas) -
    tile_n = int(min(int(tile_n), _round_up(N, 8)))
    if N >= 16:
        # keep at least two grid steps so both v7x TensorCores get work
        tile_n = min(tile_n, _round_up(pl.cdiv(N, 2), 8))
    tile_n = max(8, _round_up(tile_n, 8))
    n_tiles = pl.cdiv(N, tile_n)
    grid = (n_tiles,)

    # ---- explicit VMEM budget with per-generation cap ------------------------
    x_item = jnp.dtype(x.dtype).itemsize
    w_item = jnp.dtype(compute_dtype).itemsize
    bytes_x = 2 * tile_n * L * x_item                    # double-buffered x tile
    bytes_w = 2 * (w_ab.size * w_item + wc.size * wc.dtype.itemsize)
    bytes_mid = 4 * tile_n * (2 * D) * 4                 # f32 working set (ab/a/b/gated)
    needed = int(bytes_x + bytes_w + bytes_mid + (8 << 20))
    try:
        vmem_cap = int(getattr(pltpu.get_tpu_info(), "vmem_capacity_bytes", 64 << 20))
    except Exception:
        vmem_cap = 64 << 20
    headroom_cap = int(0.85 * vmem_cap)                  # leave compiler scratch headroom
    vmem_limit = min(max(needed, 32 << 20), headroom_cap)

    kernel = partial(gated_attn_kernel, D=D, vpu_tail=vpu_tail)
    out_shape = jax.ShapeDtypeStruct((N, C), jnp.float32)

    def build(single_buffer_weights):
        # constant-index blocks never change => single-buffer them to save VMEM
        wkw = dict(pipeline_mode=pl.Buffered(1)) if single_buffer_weights else {}
        return pl.pallas_call(
            kernel,
            out_shape=out_shape,
            grid_spec=pltpu.PrefetchScalarGridSpec(
                num_scalar_prefetch=0,
                grid=grid,
                in_specs=[
                    pl.BlockSpec((tile_n, L), lambda i: (i, 0)),          # x tile (streamed)
                    pl.BlockSpec((L, 2 * D), lambda i: (0, 0), **wkw),    # fused Wa|Wb
                    pl.BlockSpec((1, 2 * D), lambda i: (0, 0), **wkw),    # fused ba|bb
                    pl.BlockSpec(wc_block, lambda i: (0, 0), **wkw),      # Wc
                    pl.BlockSpec((1, C), lambda i: (0, 0), **wkw),        # bc
                ],
                out_specs=pl.BlockSpec((tile_n, C), lambda i: (i, 0)),
            ),
            compiler_params=pltpu.CompilerParams(
                dimension_semantics=("parallel",),
                vmem_limit_bytes=vmem_limit),
        )

    try:
        A = build(hasattr(pl, "Buffered"))(x, w_ab, b_ab, wc, bc)
        A = jax.block_until_ready(A)
    except Exception:
        # Fallback: default double-buffered weight blocks (still correct).
        A = build(False)(x, w_ab, b_ab, wc, bc)

    # The torch module returns the untouched input alongside the logits.
    return A, x


def init_params(key, L, D, n_classes):
    """Synthetic init mirroring nn.Linear shapes, stored as (in, out)."""
    ks = jax.random.split(key, 6)
    sa = 1.0 / jnp.sqrt(L)
    sc = 1.0 / jnp.sqrt(D)
    return {
        "wa": jax.random.uniform(ks[0], (L, D), jnp.float32, -sa, sa),
        "ba": jax.random.uniform(ks[1], (D,), jnp.float32, -sa, sa),
        "wb": jax.random.uniform(ks[2], (L, D), jnp.float32, -sa, sa),
        "bb": jax.random.uniform(ks[3], (D,), jnp.float32, -sa, sa),
        "wc": jax.random.uniform(ks[4], (D, n_classes), jnp.float32, -sc, sc),
        "bc": jax.random.uniform(ks[5], (n_classes,), jnp.float32, -sc, sc),
    }


def reference(x, p, compute_dtype=jnp.bfloat16):
    """Pure-JAX reference with the same bf16 rounding as the kernel."""
    f32 = jnp.float32
    xr = x.astype(compute_dtype).astype(f32)
    wa = p["wa"].astype(compute_dtype).astype(f32)
    wb = p["wb"].astype(compute_dtype).astype(f32)
    a = jnp.tanh(xr @ wa + p["ba"])
    b = jax.nn.sigmoid(xr @ wb + p["bb"])
    return (a * b) @ p["wc"] + p["bc"]


if __name__ == "__main__":
    # Small shapes consistent with the module (module defaults L=1024, D=256,
    # n_classes=1; scaled down). N is intentionally ragged and tile_n small so
    # the multi-step grid + ragged-last-tile path is exercised.
    N, L, D, n_classes = 37, 256, 128, 1
    # TODO(synk): the optional nn.Dropout(0.25) branch (dropout=True) is not
    # implemented; only the default dropout=False forward path is covered.

    key = jax.random.PRNGKey(0)
    kx, kp = jax.random.split(key)
    x = jax.random.normal(kx, (N, L), dtype=jnp.float32)
    params = init_params(kp, L, D, n_classes)

    A, x_out = attn_net_gated(x, params, tile_n=16)
    A = jax.block_until_ready(A)
    x_out = jax.block_until_ready(x_out)

    A_ref = reference(x, params)
    assert A.shape == (N, n_classes), A.shape
    assert x_out.shape == (N, L)
    assert jnp.allclose(A, A_ref, atol=1e-2, rtol=1e-2), \
        float(jnp.max(jnp.abs(A - A_ref)))
    assert jnp.array_equal(x_out, x)

    print("KERNEL_OK")
</pallas_src>

<mosaic_0001>
module attributes {stable_mosaic.version = 11 : i64} {
  func.func @gated_attn_kernel(%arg0: i32, %arg1: memref<16x256xf32, #tpu.memory_space<vmem>>, %arg2: memref<256x256xbf16, #tpu.memory_space<vmem>>, %arg3: memref<1x256xf32, #tpu.memory_space<vmem>>, %arg4: memref<1x128xf32, #tpu.memory_space<vmem>>, %arg5: memref<1x1xf32, #tpu.memory_space<vmem>>, %arg6: memref<16x1xf32, #tpu.memory_space<vmem>>) attributes {dimension_semantics = [#tpu.dimension_semantics<parallel>], iteration_bounds = array<i64: 3>, scalar_prefetch = 0 : i64, scratch_operands = 0 : i64, tpu.core_type = #tpu.core_type<tc>, window_params = [{transform_indices = @transform_0, window_bounds = array<i64: 16, 256>}, {pipeline_mode = #tpu.pipeline_mode<synchronous>, transform_indices = @transform_1, window_bounds = array<i64: 256, 256>}, {pipeline_mode = #tpu.pipeline_mode<synchronous>, transform_indices = @transform_2, window_bounds = array<i64: 1, 256>}, {pipeline_mode = #tpu.pipeline_mode<synchronous>, transform_indices = @transform_3, window_bounds = array<i64: 1, 128>}, {pipeline_mode = #tpu.pipeline_mode<synchronous>, transform_indices = @transform_4, window_bounds = array<i64: 1, 1>}, {transform_indices = @transform_5, window_bounds = array<i64: 16, 1>}]} {
    %c0 = arith.constant 0 : index
    %c0_0 = arith.constant 0 : index
    %0 = vector.load %arg1[%c0, %c0_0] : memref<16x256xf32, #tpu.memory_space<vmem>>, vector<16x256xf32>
    %1 = arith.truncf %0 : vector<16x256xf32> to vector<16x256xbf16>
    %c0_1 = arith.constant 0 : index
    %c0_2 = arith.constant 0 : index
    %2 = vector.load %arg2[%c0_1, %c0_2] : memref<256x256xbf16, #tpu.memory_space<vmem>>, vector<256x256xbf16>
    %cst = arith.constant dense<0.000000e+00> : vector<16x256xf32>
    %3 = tpu.matmul %1, %2, %cst {dimension_numbers = #tpu.dot_dimension_numbers<[1], [0], [0], [1], [0, 0, 1, 1], [], []>} : vector<16x256xbf16>, vector<256x256xbf16>, vector<16x256xf32> -> vector<16x256xf32>
    %c0_3 = arith.constant 0 : index
    %c0_4 = arith.constant 0 : index
    %4 = vector.load %arg3[%c0_3, %c0_4] : memref<1x256xf32, #tpu.memory_space<vmem>>, vector<1x256xf32>
    %5 = vector.broadcast %4 : vector<1x256xf32> to vector<16x256xf32>
    %6 = arith.addf %3, %5 : vector<16x256xf32>
    %7 = vector.extract_strided_slice %6 {offsets = [0, 0], sizes = [16, 128], strides = [1, 1]} : vector<16x256xf32> to vector<16x128xf32>
    %8 = math.tanh %7 : vector<16x128xf32>
    %9 = vector.extract_strided_slice %6 {offsets = [0, 128], sizes = [16, 128], strides = [1, 1]} : vector<16x256xf32> to vector<16x128xf32>
    %cst_5 = arith.constant 5.000000e-01 : f32
    %10 = vector.broadcast %cst_5 : f32 to vector<16x128xf32>
    %11 = arith.mulf %10, %9 : vector<16x128xf32>
    %12 = math.tanh %11 : vector<16x128xf32>
    %cst_6 = arith.constant 1.000000e+00 : f32
    %13 = vector.broadcast %cst_6 : f32 to vector<16x128xf32>
    %14 = arith.addf %12, %13 : vector<16x128xf32>
    %cst_7 = arith.constant 5.000000e-01 : f32
    %15 = vector.broadcast %cst_7 : f32 to vector<16x128xf32>
    %16 = arith.mulf %15, %14 : vector<16x128xf32>
    %17 = arith.mulf %8, %16 : vector<16x128xf32>
    %c0_8 = arith.constant 0 : index
    %c0_9 = arith.constant 0 : index
    %18 = vector.load %arg4[%c0_8, %c0_9] : memref<1x128xf32, #tpu.memory_space<vmem>>, vector<1x128xf32>
    %19 = vector.broadcast %18 : vector<1x128xf32> to vector<16x128xf32>
    %20 = arith.mulf %17, %19 : vector<16x128xf32>
    %cst_10 = arith.constant dense<0.000000e+00> : vector<16xf32>
    %21 = vector.multi_reduction <add>, %20, %cst_10 [1] : vector<16x128xf32> to vector<16xf32>
    %22 = vector.shape_cast %21 : vector<16xf32> to vector<16x1xf32>
    %c0_11 = arith.constant 0 : index
    %c0_12 = arith.constant 0 : index
    %23 = vector.load %arg5[%c0_11, %c0_12] : memref<1x1xf32, #tpu.memory_space<vmem>>, vector<1x1xf32>
    %24 = vector.broadcast %23 : vector<1x1xf32> to vector<16x1xf32>
    %25 = arith.addf %22, %24 : vector<16x1xf32>
    %c0_13 = arith.constant 0 : index
    %c0_14 = arith.constant 0 : index
    %26 = vector.load %arg6[%c0_13, %c0_14] : memref<16x1xf32, #tpu.memory_space<vmem>>, vector<16x1xf32>
    tpu.vector_store %arg6[%c0_13, %c0_14], %25 {strides = array<i32>} : memref<16x1xf32, #tpu.memory_space<vmem>>, vector<16x1xf32>,
    return
  }
  func.func @transform_0(%arg0: i32) -> (i32, i32) {
    %c0_i32 = arith.constant 0 : i32
    %c0_i32_0 = arith.constant 0 : i32
    return %arg0, %c0_i32 : i32, i32
  }
  func.func @transform_1(%arg0: i32) -> (i32, i32) {
    %c0_i32 = arith.constant 0 : i32
    %c0_i32_0 = arith.constant 0 : i32
    %c0_i32_1 = arith.constant 0 : i32
    return %c0_i32, %c0_i32_0 : i32, i32
  }
  func.func @transform_2(%arg0: i32) -> (i32, i32) {
    %c0_i32 = arith.constant 0 : i32
    %c0_i32_0 = arith.constant 0 : i32
    %c0_i32_1 = arith.constant 0 : i32
    return %c0_i32, %c0_i32_0 : i32, i32
  }
  func.func @transform_3(%arg0: i32) -> (i32, i32) {
    %c0_i32 = arith.constant 0 : i32
    %c0_i32_0 = arith.constant 0 : i32
    %c0_i32_1 = arith.constant 0 : i32
    return %c0_i32, %c0_i32_0 : i32, i32
  }
  func.func @transform_4(%arg0: i32) -> (i32, i32) {
    %c0_i32 = arith.constant 0 : i32
    %c0_i32_0 = arith.constant 0 : i32
    %c0_i32_1 = arith.constant 0 : i32
    return %c0_i32, %c0_i32_0 : i32, i32
  }
  func.func @transform_5(%arg0: i32) -> (i32, i32) {
    %c0_i32 = arith.constant 0 : i32
    %c0_i32_0 = arith.constant 0 : i32
    return %arg0, %c0_i32 : i32, i32
  }
}

module attributes {stable_mosaic.version = 11 : i64} {
  func.func @gated_attn_kernel(%arg0: i32, %arg1: memref<16x256xf32, #tpu.memory_space<vmem>>, %arg2: memref<256x256xbf16, #tpu.memory_space<vmem>>, %arg3: memref<1x256xf32, #tpu.memory_space<vmem>>, %arg4: memref<1x128xf32, #tpu.memory_space<vmem>>, %arg5: memref<1x1xf32, #tpu.memory_space<vmem>>, %arg6: memref<16x1xf32, #tpu.memory_space<vmem>>) attributes {dimension_semantics = [#tpu.dimension_semantics<parallel>], iteration_bounds = array<i64: 3>, scalar_prefetch = 0 : i64, scratch_operands = 0 : i64, tpu.core_type = #tpu.core_type<tc>, window_params = [{transform_indices = @transform_0, window_bounds = array<i64: 16, 256>}, {pipeline_mode = #tpu.pipeline_mode<synchronous>, transform_indices = @transform_1, window_bounds = array<i64: 256, 256>}, {pipeline_mode = #tpu.pipeline_mode<synchronous>, transform_indices = @transform_2, window_bounds = array<i64: 1, 256>}, {pipeline_mode = #tpu.pipeline_mode<synchronous>, transform_indices = @transform_3, window_bounds = array<i64: 1, 128>}, {pipeline_mode = #tpu.pipeline_mode<synchronous>, transform_indices = @transform_4, window_bounds = array<i64: 1, 1>}, {transform_indices = @transform_5, window_bounds = array<i64: 16, 1>}]} {
    %c0 = arith.constant 0 : index
    %c0_0 = arith.constant 0 : index
    %0 = vector.load %arg1[%c0, %c0_0] : memref<16x256xf32, #tpu.memory_space<vmem>>, vector<16x256xf32>
    %1 = arith.truncf %0 : vector<16x256xf32> to vector<16x256xbf16>
    %c0_1 = arith.constant 0 : index
    %c0_2 = arith.constant 0 : index
    %2 = vector.load %arg2[%c0_1, %c0_2] : memref<256x256xbf16, #tpu.memory_space<vmem>>, vector<256x256xbf16>
    %cst = arith.constant dense<0.000000e+00> : vector<16x256xf32>
    %3 = tpu.matmul %1, %2, %cst {dimension_numbers = #tpu.dot_dimension_numbers<[1], [0], [0], [1], [0, 0, 1, 1], [], []>} : vector<16x256xbf16>, vector<256x256xbf16>, vector<16x256xf32> -> vector<16x256xf32>
    %c0_3 = arith.constant 0 : index
    %c0_4 = arith.constant 0 : index
    %4 = vector.load %arg3[%c0_3, %c0_4] : memref<1x256xf32, #tpu.memory_space<vmem>>, vector<1x256xf32>
    %5 = vector.broadcast %4 : vector<1x256xf32> to vector<16x256xf32>
    %6 = arith.addf %3, %5 : vector<16x256xf32>
    %7 = vector.extract_strided_slice %6 {offsets = [0, 0], sizes = [16, 128], strides = [1, 1]} : vector<16x256xf32> to vector<16x128xf32>
    %8 = math.tanh %7 : vector<16x128xf32>
    %9 = vector.extract_strided_slice %6 {offsets = [0, 128], sizes = [16, 128], strides = [1, 1]} : vector<16x256xf32> to vector<16x128xf32>
    %cst_5 = arith.constant 5.000000e-01 : f32
    %10 = vector.broadcast %cst_5 : f32 to vector<16x128xf32>
    %11 = arith.mulf %10, %9 : vector<16x128xf32>
    %12 = math.tanh %11 : vector<16x128xf32>
    %cst_6 = arith.constant 1.000000e+00 : f32
    %13 = vector.broadcast %cst_6 : f32 to vector<16x128xf32>
    %14 = arith.addf %12, %13 : vector<16x128xf32>
    %cst_7 = arith.constant 5.000000e-01 : f32
    %15 = vector.broadcast %cst_7 : f32 to vector<16x128xf32>
    %16 = arith.mulf %15, %14 : vector<16x128xf32>
    %17 = arith.mulf %8, %16 : vector<16x128xf32>
    %c0_8 = arith.constant 0 : index
    %c0_9 = arith.constant 0 : index
    %18 = vector.load %arg4[%c0_8, %c0_9] : memref<1x128xf32, #tpu.memory_space<vmem>>, vector<1x128xf32>
    %19 = vector.broadcast %18 : vector<1x128xf32> to vector<16x128xf32>
    %20 = arith.mulf %17, %19 : vector<16x128xf32>
    %cst_10 = arith.constant dense<0.000000e+00> : vector<16xf32>
    %21 = vector.multi_reduction <add>, %20, %cst_10 [1] : vector<16x128xf32> to vector<16xf32>
    %22 = vector.shape_cast %21 : vector<16xf32> to vector<16x1xf32>
    %c0_11 = arith.constant 0 : index
    %c0_12 = arith.constant 0 : index
    %23 = vector.load %arg5[%c0_11, %c0_12] : memref<1x1xf32, #tpu.memory_space<vmem>>, vector<1x1xf32>
    %24 = vector.broadcast %23 : vector<1x1xf32> to vector<16x1xf32>
    %25 = arith.addf %22, %24 : vector<16x1xf32>
    %c0_13 = arith.constant 0 : index
    %c0_14 = arith.constant 0 : index
    %26 = vector.load %arg6[%c0_13, %c0_14] : memref<16x1xf32, #tpu.memory_space<vmem>>, vector<16x1xf32>
    tpu.vector_store %arg6[%c0_13, %c0_14], %25 {strides = array<i32>} : memref<16x1xf32, #tpu.memory_space<vmem>>, vector<16x1xf32>,
    return
  }
  func.func @transform_0(%arg0: i32) -> (i32, i32) {
    %c0_i32 = arith.constant 0 : i32
    %c0_i32_0 = arith.constant 0 : i32
    return %arg0, %c0_i32 : i32, i32
  }
  func.func @transform_1(%arg0: i32) -> (i32, i32) {
    %c0_i32 = arith.constant 0 : i32
    %c0_i32_0 = arith.constant 0 : i32
    %c0_i32_1 = arith.constant 0 : i32
    return %c0_i32, %c0_i32_0 : i32, i32
  }
  func.func @transform_2(%arg0: i32) -> (i32, i32) {
    %c0_i32 = arith.constant 0 : i32
    %c0_i32_0 = arith.constant 0 : i32
    %c0_i32_1 = arith.constant 0 : i32
    return %c0_i32, %c0_i32_0 : i32, i32
  }
  func.func @transform_3(%arg0: i32) -> (i32, i32) {
    %c0_i32 = arith.constant 0 : i32
    %c0_i32_0 = arith.constant 0 : i32
    %c0_i32_1 = arith.constant 0 : i32
    return %c0_i32, %c0_i32_0 : i32, i32
  }
  func.func @transform_4(%arg0: i32) -> (i32, i32) {
    %c0_i32 = arith.constant 0 : i32
    %c0_i32_0 = arith.constant 0 : i32
    %c0_i32_1 = arith.constant 0 : i32
    return %c0_i32, %c0_i32_0 : i32, i32
  }
  func.func @transform_5(%arg0: i32) -> (i32, i32) {
    %c0_i32 = arith.constant 0 : i32
    %c0_i32_0 = arith.constant 0 : i32
    return %arg0, %c0_i32 : i32, i32
  }
}

</mosaic_0001>

<llo_original>
// kernel: tpu_custom_call.1
$region0: #{tpu_custom_call.1}
  #allocation0 [shape = 'u32[]', space=smem, size = 0x4, offset = 0x4, fixed_abs, tag = 'smem constant byte address 0x4 - core index']
  #allocation1 [shape = 'u32[144,128]{1,0:T(1,128)}', space=vmem, size = 0x12000, scoped, tag = 'internal scratch']
  #allocation2 [shape = 'f32[1,1]{1,0:T(1,128)S(1)}', space=vmem, size = 0x200, scoped, tag = 'scoped memory for tpu_custom_call.1']
  %s0 = inlined_call_operand.hbm [shape: f32[37,256], index: 0, kind: input, shape index: {}]
  %s1 = inlined_call_operand.hbm [shape: bf16[256,256], index: 1, kind: input, shape index: {}]
  %s2 = inlined_call_operand.vmem [shape: f32[1,256], index: 2, kind: input, shape index: {}]
  %s3 = inlined_call_operand.vmem [shape: f32[1,128], index: 3, kind: input, shape index: {}]
  %s4 = inlined_call_operand.<no memory space> [shape: f32[1,1], index: 4, kind: input, shape index: {}]
  %s5 = inlined_call_operand.vmem [shape: f32[37,1], index: 5, kind: output, shape index: {}]
  %s6 = sld [smem:[#allocation0]]
  $region109: #{tpu_custom_call.1} parent=0
    _
  %s8 = ssub.s32 1, %s6
  %s9 = scalar_select 0, %s8, %s6
  %v10 = vstv %s4
  %11 = vst [vmem:[#allocation2] sm:$0x1] %v10
  $region1: #{tpu_custom_call.1} parent=0
    #allocation3 [shape = 'u8[32768]{0}', space=vmem, size = 0x8000, scoped, tag = 'input window, operand 0']
    #allocation4 [shape = 's32[2]{0}', space=sflag, size = 0x8, scoped, tag = 'scoped memory for tpu_custom_call.1']
    #allocation5 [shape = 'u8[131072]{0}', space=vmem, size = 0x20000, scoped, tag = 'input window, operand 1, single buffered']
    #allocation6 [shape = 's32[1]{0}', space=sflag, size = 0x4, scoped, tag = 'scoped memory for tpu_custom_call.1']
    #allocation7 [shape = 'u8[16384]{0}', space=vmem, size = 0x4000, scoped, tag = 'output window, operand 0']
    %12 = vsyncpa [#allocation4], 0
    %s13 = scalar_lea.sflag [#allocation4], 1
    %14 = vsyncpa %s13, 0
    %15 = vsyncpa [#allocation6], 0
    loop: start=0, step=1, limit=5
    $region2: #{tpu_custom_call.1} parent=1 // loop_pre_header
      _
    $region3: #{tpu_custom_call.1} parent=1 // loop_header
      %s17 = sphi 0, %s21
      %p18 = scmp.ge.s32.totalorder %s17, 5
      %s27 = sphi 0, %s29
      %s30 = sphi 0, %s27
      %s31 = sphi 0, %s30
      %s47 = sphi 0, %s31
      %s51 = sphi 0, %s51
      %s53 = sphi 0, %s51
      %s54 = sphi 0, %s53
      %s68 = sphi 0, %s54
      %s72 = sphi 0, %s72
      %s74 = sphi 0, %s72
      %s75 = sphi 0, %s74
      %s89 = sphi 0, %s75
      %s93 = sphi 0, %s93
      %s95 = sphi 0, %s93
      %s96 = sphi 0, %s95
      %s110 = sphi 0, %s96
      %s114 = sphi 0, %s114
      %s116 = sphi 0, %s114
      %s117 = sphi 0, %s116
      %s131 = sphi 0, %s117
      %s137 = sphi 0, %s139
      %s140 = sphi 0, %s137
      %s141 = sphi 0, %s140
      %s157 = sphi 0, %s141
    $region4: #{tpu_custom_call.1} parent=1 // loop_header_branch
      %20 = sbr.rel (%p18) target = $region8
    $region5: #{tpu_custom_call.1} parent=1 // loop_body
      %s22 = ssub.s32 %s17, 1
      %s23 = ssub.s32 %s17, 2
      %s24 = sadd.s32 %s17, 1
      %s25 = ssub.s32 %s17, %s24
      %p26 = scmp.eq.s32.totalorder %s25, 0
      %s28 = sadd.s32 %s27, 1
      %s29 = scalar_select %p26, %s27, %s28
      %p32 = pneg %p26
      %p33 = scmp.eq.s32.totalorder %s17, 2
      %p34 = por %p32, %p33
      %p35 = scmp.ne.s32.totalorder %s27, %s30
      %p36 = scmp.eq.s32.totalorder %s17, 0
      %p37 = por %p35, %p36
      %p38 = scmp.ne.s32.totalorder %s27, %s30
      %p39 = scmp.eq.s32.totalorder %s22, 2
      %p40 = por %p38, %p39
      %p41 = scmp.ne.s32.totalorder %s30, %s31
      %p42 = scmp.eq.s32.totalorder %s22, 0
      %p43 = por %p41, %p42
      %p44 = scmp.ne.s32.totalorder %s30, %s31
      %p45 = scmp.eq.s32.totalorder %s23, 2
      %p46 = por %p44, %p45
      %p48 = scmp.ne.s32.totalorder %s31, %s47
      %p49 = scmp.eq.s32.totalorder %s23, 0
      %p50 = por %p48, %p49
      %s52 = sadd.s32 %s51, 1
      %p55 = scmp.eq.s32.totalorder %s17, 2
      %p56 = scmp.ne.s32.totalorder %s51, %s53
      %p57 = scmp.eq.s32.totalorder %s17, 0
      %p58 = por %p56, %p57
      %p59 = scmp.ne.s32.totalorder %s51, %s53
      %p60 = scmp.eq.s32.totalorder %s22, 2
      %p61 = por %p59, %p60
      %p62 = scmp.ne.s32.totalorder %s53, %s54
      %p63 = scmp.eq.s32.totalorder %s22, 0
      %p64 = por %p62, %p63
      %p65 = scmp.ne.s32.totalorder %s53, %s54
      %p66 = scmp.eq.s32.totalorder %s23, 2
      %p67 = por %p65, %p66
      %p69 = scmp.ne.s32.totalorder %s54, %s68
      %p70 = scmp.eq.s32.totalorder %s23, 0
      %p71 = por %p69, %p70
      %s73 = sadd.s32 %s72, 1
      %p76 = scmp.eq.s32.totalorder %s17, 2
      %p77 = scmp.ne.s32.totalorder %s72, %s74
      %p78 = scmp.eq.s32.totalorder %s17, 0
      %p79 = por %p77, %p78
      %p80 = scmp.ne.s32.totalorder %s72, %s74
      %p81 = scmp.eq.s32.totalorder %s22, 2
      %p82 = por %p80, %p81
      %p83 = scmp.ne.s32.totalorder %s74, %s75
      %p84 = scmp.eq.s32.totalorder %s22, 0
      %p85 = por %p83, %p84
      %p86 = scmp.ne.s32.totalorder %s74, %s75
      %p87 = scmp.eq.s32.totalorder %s23, 2
      %p88 = por %p86, %p87
      %p90 = scmp.ne.s32.totalorder %s75, %s89
      %p91 = scmp.eq.s32.totalorder %s23, 0
      %p92 = por %p90, %p91
      %s94 = sadd.s32 %s93, 1
      %p97 = scmp.eq.s32.totalorder %s17, 2
      %p98 = scmp.ne.s32.totalorder %s93, %s95
      %p99 = scmp.eq.s32.totalorder %s17, 0
      %p100 = por %p98, %p99
      %p101 = scmp.ne.s32.totalorder %s93, %s95
      %p102 = scmp.eq.s32.totalorder %s22, 2
      %p103 = por %p101, %p102
      %p104 = scmp.ne.s32.totalorder %s95, %s96
      %p105 = scmp.eq.s32.totalorder %s22, 0
      %p106 = por %p104, %p105
      %p107 = scmp.ne.s32.totalorder %s95, %s96
      %p108 = scmp.eq.s32.totalorder %s23, 2
      %p109 = por %p107, %p108
      %p111 = scmp.ne.s32.totalorder %s96, %s110
      %p112 = scmp.eq.s32.totalorder %s23, 0
      %p113 = por %p111, %p112
      %s115 = sadd.s32 %s114, 1
      %p118 = scmp.eq.s32.totalorder %s17, 2
      %p119 = scmp.ne.s32.totalorder %s114, %s116
      %p120 = scmp.eq.s32.totalorder %s17, 0
      %p121 = por %p119, %p120
      %p122 = scmp.ne.s32.totalorder %s114, %s116
      %p123 = scmp.eq.s32.totalorder %s22, 2
      %p124 = por %p122, %p123
      %p125 = scmp.ne.s32.totalorder %s116, %s117
      %p126 = scmp.eq.s32.totalorder %s22, 0
      %p127 = por %p125, %p126
      %p128 = scmp.ne.s32.totalorder %s116, %s117
      %p129 = scmp.eq.s32.totalorder %s23, 2
      %p130 = por %p128, %p129
      %p132 = scmp.ne.s32.totalorder %s117, %s131
      %p133 = scmp.eq.s32.totalorder %s23, 0
      %p134 = por %p132, %p133
      %s135 = ssub.s32 %s17, %s24
      %p136 = scmp.eq.s32.totalorder %s135, 0
      %s138 = sadd.s32 %s137, 1
      %s139 = scalar_select %p136, %s137, %s138
      %p142 = pneg %p136
      %p143 = scmp.eq.s32.totalorder %s17, 2
      %p144 = por %p142, %p143
      %p145 = scmp.ne.s32.totalorder %s137, %s140
      %p146 = scmp.eq.s32.totalorder %s17, 0
      %p147 = por %p145, %p146
      %p148 = scmp.ne.s32.totalorder %s137, %s140
      %p149 = scmp.eq.s32.totalorder %s22, 2
      %p150 = por %p148, %p149
      %p151 = scmp.ne.s32.totalorder %s140, %s141
      %p152 = scmp.eq.s32.totalorder %s22, 0
      %p153 = por %p151, %p152
      %p154 = scmp.ne.s32.totalorder %s140, %s141
      %p155 = scmp.eq.s32.totalorder %s23, 2
      %p156 = por %p154, %p155
      %p158 = scmp.ne.s32.totalorder %s141, %s157
      %p159 = scmp.eq.s32.totalorder %s23, 0
      %p160 = por %p158, %p159
      %p161 = scmp.le.s32.totalorder 1, %s17
      %p162 = scmp.lt.s32.totalorder %s17, 4
      %p163 = pnand %p161, %p162
      %p164 = pneg %p163
      // Predicated region
      $region9: #{tpu_custom_call.1} parent=5 // pred_check
        _
      $region10: #{tpu_custom_call.1} parent=5 // pred_check_branch
        %166 = sbr.rel (%p163) target = $region12
      $region11: #{tpu_custom_call.1} parent=5 // pred_region
        %s167 = ssub.s32 %s17, 1
        // Predicated region
        $region13: #{tpu_custom_call.1} parent=11 // pred_check
          %p168 = pneg %p64
        $region14: #{tpu_custom_call.1} parent=11 // pred_check_branch
          %170 = sbr.rel (%p168) target = $region16
        $region15: #{tpu_custom_call.1} parent=11 // pred_region
          %s172 = ssub.s32 4096, 4096
          %173 = vsyncadd [#allocation6], %s172
          %s174 = sshll.u32 [#allocation5], 4
          %s175 = int_to_ptr.vmem [resolvable:$true] %s174
          %180 = dma.hbm_to_vmem [thread:$0]  %s1, 4096, %s175, [#allocation6], 128, 128, 8
        $region16: #{tpu_custom_call.1} parent=11 // pred_fallthru
          _
        // Predicated region
        $region17: #{tpu_custom_call.1} parent=11 // pred_check
          %p181 = pneg %p85
        $region18: #{tpu_custom_call.1} parent=11 // pred_check_branch
          %183 = sbr.rel (%p181) target = $region20
        $region19: #{tpu_custom_call.1} parent=11 // pred_region
          _
        $region20: #{tpu_custom_call.1} parent=11 // pred_fallthru
          _
        // Predicated region
        $region21: #{tpu_custom_call.1} parent=11 // pred_check
          %p184 = pneg %p106
        $region22: #{tpu_custom_call.1} parent=11 // pred_check_branch
          %186 = sbr.rel (%p184) target = $region24
        $region23: #{tpu_custom_call.1} parent=11 // pred_region
          _
        $region24: #{tpu_custom_call.1} parent=11 // pred_fallthru
          _
        // Predicated region
        $region25: #{tpu_custom_call.1} parent=11 // pred_check
          %p187 = pneg %p127
        $region26: #{tpu_custom_call.1} parent=11 // pred_check_branch
          %189 = sbr.rel (%p187) target = $region28
        $region27: #{tpu_custom_call.1} parent=11 // pred_region
          _
        $region28: #{tpu_custom_call.1} parent=11 // pred_fallthru
          _
      $region12: #{tpu_custom_call.1} parent=5 // pred_fallthru
        _
      %p190 = scmp.lt.s32.totalorder %s17, 3
      // Predicated region
      $region29: #{tpu_custom_call.1} parent=5 // pred_check
        %p191 = pneg %p190
      $region30: #{tpu_custom_call.1} parent=5 // pred_check_branch
        %193 = sbr.rel (%p191) target = $region32
      $region31: #{tpu_custom_call.1} parent=5 // pred_region
        // Predicated region
        $region33: #{tpu_custom_call.1} parent=31 // pred_check
          %p194 = pneg %p37
        $region34: #{tpu_custom_call.1} parent=31 // pred_check_branch
          %196 = sbr.rel (%p194) target = $region36
        $region35: #{tpu_custom_call.1} parent=31 // pred_region
          %s197 = sand.u32 %s27, 1
          %s198 = scalar_lea.sflag [#allocation4], %s197
          %s199 = sand.u32 %s27, 1
          %s200 = smul.addr %s199, 32
          %s201 = scalar_lea.vmem [#allocation3], %s200
          %s202 = smul.u32 2, %s17
          %s203 = ssub.s32 5, %s202
          %p204 = scmp.lt.s32.totalorder %s203, 2
          %s205 = scalar_select %p204, %s203, 2
          %s206 = smul.u32 128, %s205
          %s207 = smul.u32 %s206, 2
          %s209 = ssub.s32 512, %s207
          %210 = vsyncadd %s198, %s209
          %p211 = scmp.ne.s32.totalorder 0, %s207
          %s212 = smul.addr %s202, 2
          %s213 = smul.addr %s212, 128
          %s214 = scalar_lea.hbm %s0, %s213
          %s215 = smul.u32 16, %s205
          %s216 = sshll.u32 %s201, 4
          %s217 = int_to_ptr.vmem [resolvable:$true] %s216
          %s218 = sshll.u32 %s215, 4
          %222 = dma.hbm_to_vmem [thread:$0]  (%p211), %s214, %s218, %s217, %s198, 256, 256, 16
        $region36: #{tpu_custom_call.1} parent=31 // pred_fallthru
          _
      $region32: #{tpu_custom_call.1} parent=5 // pred_fallthru
        _
      %p223 = scmp.le.s32.totalorder 1, %s17
      %p224 = scmp.lt.s32.totalorder %s17, 4
      %p225 = pnand %p223, %p224
      %p226 = pneg %p225
      // Predicated region
      $region37: #{tpu_custom_call.1} parent=5 // pred_check
        _
      $region38: #{tpu_custom_call.1} parent=5 // pred_check_branch
        %228 = sbr.rel (%p225) target = $region40
      $region39: #{tpu_custom_call.1} parent=5 // pred_region
        %s229 = ssub.s32 %s17, 1
        %s230 = sand.u32 %s30, 1
        %s231 = scalar_lea.sflag [#allocation4], %s230
        %s232 = sand.u32 %s30, 1
        %s233 = smul.addr %s232, 32
        %s234 = scalar_lea.vmem [#allocation3], %s233
        // Predicated region
        $region41: #{tpu_custom_call.1} parent=39 // pred_check
          %p235 = pneg %p43
        $region42: #{tpu_custom_call.1} parent=39 // pred_check_branch
          %237 = sbr.rel (%p235) target = $region44
        $region43: #{tpu_custom_call.1} parent=39 // pred_region
          %238 = dma.done %s231, 512
        $region44: #{tpu_custom_call.1} parent=39 // pred_fallthru
          _
        // Predicated region
        $region45: #{tpu_custom_call.1} parent=39 // pred_check
          %p239 = pneg %p64
        $region46: #{tpu_custom_call.1} parent=39 // pred_check_branch
          %241 = sbr.rel (%p239) target = $region48
        $region47: #{tpu_custom_call.1} parent=39 // pred_region
          %242 = dma.done [#allocation6], 4096
        $region48: #{tpu_custom_call.1} parent=39 // pred_fallthru
          _
        %s243 = sand.u32 %s30, 1
        %s244 = scalar_lea.sflag [#allocation4], %s243
        %s245 = sand.u32 %s30, 1
        %s246 = smul.addr %s245, 32
        %s247 = scalar_lea.vmem [#allocation3], %s246
        %p248 = pneg %p43
        %p249 = pneg %p40
        %p250 = pneg %p64
        %p251 = pneg %p61
        %p252 = pneg %p85
        %p253 = pneg %p82
        %p254 = pneg %p106
        %p255 = pneg %p103
        %p256 = pneg %p127
        %p257 = pneg %p124
        %p258 = pneg %p153
        %p259 = pneg %p150
        %s260 = sand.u32 %s140, 1
        %s261 = sand.u32 %s140, 1
        %s262 = smul.addr %s261, 16
        %s263 = scalar_lea.vmem [#allocation7], %s262
        %s264 = smul.u32 2, %s22
        %s265 = ssub.s32 5, %s264
        %p266 = scmp.lt.s32.totalorder %s265, 2
        %s267 = scalar_select %p266, %s265, 2
        %s268 = smul.u32 128, %s267
        %s269 = smul.u32 %s268, 2
        %s270 = smul.u32 2, %s22
        %s271 = ssub.s32 5, %s270
        %p272 = scmp.lt.s32.totalorder %s271, 2
        %s273 = scalar_select %p272, %s271, 2
        %s274 = smul.u32 128, %s273
        %v275 = vld [vmem:[%s234] sm:$0xff]
        %v276 = vld [vmem:[%s234 + $0x8] sm:$0xff]
        %v277 = vld [vmem:[%s234 + $0x10] sm:$0xff]
        %v278 = vld [vmem:[%s234 + $0x18] sm:$0xff]
        %v279 = vpack.c.bf16 %v277, %v275
        %v280 = vpack.c.bf16 %v278, %v276
        %v281 = vld [vmem:[#allocation5] sm:$0xff]
        %v282 = vld [vmem:[#allocation5 + $0x8] sm:$0xff]
        %v283 = vld [vmem:[#allocation5 + $0x10] sm:$0xff]
        %v284 = vld [vmem:[#allocation5 + $0x18] sm:$0xff]
        %v285 = vld [vmem:[#allocation5 + $0x20] sm:$0xff]
        %v286 = vld [vmem:[#allocation5 + $0x28] sm:$0xff]
        %v287 = vld [vmem:[#allocation5 + $0x30] sm:$0xff]
        %v288 = vld [vmem:[#allocation5 + $0x38] sm:$0xff]
        %v289 = vld [vmem:[#allocation5 + $0x40] sm:$0xff]
        %v290 = vld [vmem:[#allocation5 + $0x48] sm:$0xff]
        %v291 = vld [vmem:[#allocation5 + $0x50] sm:$0xff]
        %v292 = vld [vmem:[#allocation5 + $0x58] sm:$0xff]
        %v293 = vld [vmem:[#allocation5 + $0x60] sm:$0xff]
        %v294 = vld [vmem:[#allocation5 + $0x68] sm:$0xff]
        %v295 = vld [vmem:[#allocation5 + $0x70] sm:$0xff]
        %v296 = vld [vmem:[#allocation5 + $0x78] sm:$0xff]
        %v297 = vld [vmem:[#allocation5 + $0x80] sm:$0xff]
        %v298 = vld [vmem:[#allocation5 + $0x88] sm:$0xff]
        %v299 = vld [vmem:[#allocation5 + $0x90] sm:$0xff]
        %v300 = vld [vmem:[#allocation5 + $0x98] sm:$0xff]
        %v301 = vld [vmem:[#allocation5 + $0xa0] sm:$0xff]
        %v302 = vld [vmem:[#allocation5 + $0xa8] sm:$0xff]
        %v303 = vld [vmem:[#allocation5 + $0xb0] sm:$0xff]
        %v304 = vld [vmem:[#allocation5 + $0xb8] sm:$0xff]
        %v305 = vld [vmem:[#allocation5 + $0xc0] sm:$0xff]
        %v306 = vld [vmem:[#allocation5 + $0xc8] sm:$0xff]
        %v307 = vld [vmem:[#allocation5 + $0xd0] sm:$0xff]
        %v308 = vld [vmem:[#allocation5 + $0xd8] sm:$0xff]
        %v309 = vld [vmem:[#allocation5 + $0xe0] sm:$0xff]
        %v310 = vld [vmem:[#allocation5 + $0xe8] sm:$0xff]
        %v311 = vld [vmem:[#allocation5 + $0xf0] sm:$0xff]
        %v312 = vld [vmem:[#allocation5 + $0xf8] sm:$0xff]
        %v313 = vld [vmem:[%s2] sm:$0x3]
        %v315 = vlaneseq
        %v316 = vshrl.u32 %v315, 7
        %v317 = vsub.s32 0, %v316
        %v318 = vrot.slane %v313, %v317
        %v319 = vlaneseq
        %v320 = vshrl.u32 %v319, 7
        %v321 = vsub.s32 1, %v320
        %v322 = vrot.slane %v313, %v321
        %v357 = vunpack.c.l.b16 %v281
        %v358 = vunpack.c.h.b16 %v281
        %v359 = vunpack.c.l.b16 %v282
        %v360 = vunpack.c.h.b16 %v282
        %v361 = vunpack.c.l.b16 %v283
        %v362 = vunpack.c.h.b16 %v283
        %v363 = vunpack.c.l.b16 %v284
        %v364 = vunpack.c.h.b16 %v284
        %v365 = vunpack.c.l.b16 %v285
        %v366 = vunpack.c.h.b16 %v285
        %v367 = vunpack.c.l.b16 %v286
        %v368 = vunpack.c.h.b16 %v286
        %v369 = vunpack.c.l.b16 %v287
        %v370 = vunpack.c.h.b16 %v287
        %v371 = vunpack.c.l.b16 %v288
        %v372 = vunpack.c.h.b16 %v288
        %v373 = vunpack.c.l.b16 %v289
        %v374 = vunpack.c.h.b16 %v289
        %v375 = vunpack.c.l.b16 %v290
        %v376 = vunpack.c.h.b16 %v290
        %v377 = vunpack.c.l.b16 %v291
        %v378 = vunpack.c.h.b16 %v291
        %v379 = vunpack.c.l.b16 %v292
        %v380 = vunpack.c.h.b16 %v292
        %v381 = vunpack.c.l.b16 %v293
        %v382 = vunpack.c.h.b16 %v293
        %v383 = vunpack.c.l.b16 %v294
        %v384 = vunpack.c.h.b16 %v294
        %v385 = vunpack.c.l.b16 %v295
        %v386 = vunpack.c.h.b16 %v295
        %v387 = vunpack.c.l.b16 %v296
        %v388 = vunpack.c.h.b16 %v296
        %v389 = vunpack.c.l.b16 %v297
        %v390 = vunpack.c.h.b16 %v297
        %v391 = vunpack.c.l.b16 %v298
        %v392 = vunpack.c.h.b16 %v298
        %v393 = vunpack.c.l.b16 %v299
        %v394 = vunpack.c.h.b16 %v299
        %v395 = vunpack.c.l.b16 %v300
        %v396 = vunpack.c.h.b16 %v300
        %v397 = vunpack.c.l.b16 %v301
        %v398 = vunpack.c.h.b16 %v301
        %v399 = vunpack.c.l.b16 %v302
        %v400 = vunpack.c.h.b16 %v302
        %v401 = vunpack.c.l.b16 %v303
        %v402 = vunpack.c.h.b16 %v303
        %v403 = vunpack.c.l.b16 %v304
        %v404 = vunpack.c.h.b16 %v304
        %v405 = vunpack.c.l.b16 %v305
        %v406 = vunpack.c.h.b16 %v305
        %v407 = vunpack.c.l.b16 %v306
        %v408 = vunpack.c.h.b16 %v306
        %v409 = vunpack.c.l.b16 %v307
        %v410 = vunpack.c.h.b16 %v307
        %v411 = vunpack.c.l.b16 %v308
        %v412 = vunpack.c.h.b16 %v308
        %v413 = vunpack.c.l.b16 %v309
        %v414 = vunpack.c.h.b16 %v309
        %v415 = vunpack.c.l.b16 %v310
        %v416 = vunpack.c.h.b16 %v310
        %v417 = vunpack.c.l.b16 %v311
        %v418 = vunpack.c.h.b16 %v311
        %v419 = vunpack.c.l.b16 %v312
        %v420 = vunpack.c.h.b16 %v312
        %v421 = vpack.c.b16 %v359, %v357
        %v422 = vpack.c.b16 %v360, %v358
        %v423 = vpack.c.b16 %v363, %v361
        %v424 = vpack.c.b16 %v364, %v362
        %v425 = vpack.c.b16 %v367, %v365
        %v426 = vpack.c.b16 %v368, %v366
        %v427 = vpack.c.b16 %v371, %v369
        %v428 = vpack.c.b16 %v372, %v370
        %v429 = vpack.c.b16 %v375, %v373
        %v430 = vpack.c.b16 %v376, %v374
        %v431 = vpack.c.b16 %v379, %v377
        %v432 = vpack.c.b16 %v380, %v378
        %v433 = vpack.c.b16 %v383, %v381
        %v434 = vpack.c.b16 %v384, %v382
        %v435 = vpack.c.b16 %v387, %v385
        %v436 = vpack.c.b16 %v388, %v386
        %v437 = vpack.c.b16 %v391, %v389
        %v438 = vpack.c.b16 %v392, %v390
        %v439 = vpack.c.b16 %v395, %v393
        %v440 = vpack.c.b16 %v396, %v394
        %v441 = vpack.c.b16 %v399, %v397
        %v442 = vpack.c.b16 %v400, %v398
        %v443 = vpack.c.b16 %v403, %v401
        %v444 = vpack.c.b16 %v404, %v402
        %v445 = vpack.c.b16 %v407, %v405
        %v446 = vpack.c.b16 %v408, %v406
        %v447 = vpack.c.b16 %v411, %v409
        %v448 = vpack.c.b16 %v412, %v410
        %v449 = vpack.c.b16 %v415, %v413
        %v450 = vpack.c.b16 %v416, %v414
        %v451 = vpack.c.b16 %v419, %v417
        %v452 = vpack.c.b16 %v420, %v418
        %485 = vmatprep.subr.bf16.mxu0 %v422
        %486 = vmatpush1.bf16.msra.mxu0 %v421
        %487 = vmatprep.subr.bf16.mxu0 %v424
        %488 = vmatpush1.bf16.msra.mxu0 %v423
        %489 = vmatprep.subr.bf16.mxu0 %v426
        %490 = vmatpush1.bf16.msra.mxu0 %v425
        %491 = vmatprep.subr.bf16.mxu0 %v428
        %492 = vmatpush1.bf16.msra.mxu0 %v427
        %493 = vmatprep.subr.bf16.mxu0 %v430
        %494 = vmatpush1.bf16.msra.mxu0 %v429
        %495 = vmatprep.subr.bf16.mxu0 %v432
        %496 = vmatpush1.bf16.msra.mxu0 %v431
        %497 = vmatprep.subr.bf16.mxu0 %v434
        %498 = vmatpush1.bf16.msra.mxu0 %v433
        %499 = vmatprep.subr.bf16.mxu0 %v436
        %500 = vmatpush1.bf16.msra.mxu0 %v435
        %501 = vmatprep.subr.bf16.mxu0 %v438
        %502 = vmatpush1.bf16.msra.mxu0 %v437
        %503 = vmatprep.subr.bf16.mxu0 %v440
        %504 = vmatpush1.bf16.msra.mxu0 %v439
        %505 = vmatprep.subr.bf16.mxu0 %v442
        %506 = vmatpush1.bf16.msra.mxu0 %v441
        %507 = vmatprep.subr.bf16.mxu0 %v444
        %508 = vmatpush1.bf16.msra.mxu0 %v443
        %509 = vmatprep.subr.bf16.mxu0 %v446
        %510 = vmatpush1.bf16.msra.mxu0 %v445
        %511 = vmatprep.subr.bf16.mxu0 %v448
        %512 = vmatpush1.bf16.msra.mxu0 %v447
        %513 = vmatprep.subr.bf16.mxu0 %v450
        %514 = vmatpush1.bf16.msra.mxu0 %v449
        %515 = vmatprep.subr.bf16.mxu0 %v452
        %516 = vmatpush1.bf16.msra.mxu0 %v451
        %517 = vmatprep.mubr.bf16.mxu0 %v280
        %518 = vmatmul.mubr.bf16.gmra.mrb[0].mxu0 %v279
        %v519 = vpop.f32.mrb[0].mxu0
        %v520 = vadd.f32 %v318, %v519
        %v521 = vpop.f32.mrb[0].mxu0
        %v522 = vadd.f32 %v322, %v521
        %v523 = vpop.f32.mrb[0].mxu0
        %v524 = vadd.f32 %v318, %v523
        %v525 = vpop.f32.mrb[0].mxu0
        %v526 = vadd.f32 %v322, %v525
        %527 = vdwg.mxu0
        %v528 = vtanh.pop %v520
        %v529 = vtanh.pop %v524
        %v530 = vmul.f32 %v522, 0.5
        %v531 = vmul.f32 %v526, 0.5
        %v532 = vtanh.pop %v530
        %v533 = vtanh.pop %v531
        %v534 = vadd.f32 %v532, 1.0
        %v535 = vadd.f32 %v533, 1.0
        %v536 = vmul.f32 %v534, 0.5
        %v537 = vmul.f32 %v535, 0.5
        %v538 = vmul.f32 %v528, %v536
        %v539 = vmul.f32 %v529, %v537
        %v540 = vld [vmem:[%s3] sm:$0x1]
        %v542 = vlaneseq
        %v543 = vshrl.u32 %v542, 7
        %v544 = vsub.s32 0, %v543
        %v545 = vrot.slane %v540, %v544
        %v547 = vmul.f32 %v538, %v545
        %v548 = vmul.f32 %v539, %v545
        %549 = vadd.xlane.f32.xlu0 %v547
        %v550 = vpop.xlane.xlu0 %549
        %551 = vadd.xlane.f32.xlu0 %v548
        %v552 = vpop.xlane.xlu0 %551
        %v553 = vld [vmem:[#allocation2] sm:$0x1]
        %v555 = vlaneseq
        %v556 = vshrl.u32 %v555, 7
        %v557 = vsub.s32 0, %v556
        %v558 = vrot.slane %v553, %v557
        %v560 = vadd.f32 %v550, %v558
        %v561 = vadd.f32 %v552, %v558
        %vm562 = vcmask 7168
        %563 = vst.msk [vmem:[%s263] sm:$0xff] %vm562, %v560
        %564 = vst.msk [vmem:[%s263 + $0x8] sm:$0xff] %vm562, %v561
        %s565 = sand.u32 %s140, 1
        %s566 = sand.u32 %s140, 1
        %s567 = smul.addr %s566, 16
        %s568 = scalar_lea.vmem [#allocation7], %s567
        // Predicated region
        $region49: #{tpu_custom_call.1} parent=39 // pred_check
          %p569 = pneg %p150
        $region50: #{tpu_custom_call.1} parent=39 // pred_check_branch
          %571 = sbr.rel (%p569) target = $region52
        $region51: #{tpu_custom_call.1} parent=39 // pred_region
          %s572 = smul.u32 2, %s22
          %s573 = ssub.s32 5, %s572
          %p574 = scmp.lt.s32.totalorder %s573, 2
          %s575 = scalar_select %p574, %s573, 2
          %s576 = smul.u32 128, %s575
          %p577 = scmp.ne.s32.totalorder 0, %s576
          %s578 = smul.addr %s572, 8
          %s579 = scalar_lea.vmem %s5, %s578
          // Predicated region
          $region53: #{tpu_custom_call.1} parent=51 // pred_check
            %p580 = pneg %p577
          $region54: #{tpu_custom_call.1} parent=51 // pred_check_branch
            %582 = sbr.rel (%p580) target = $region56
          $region55: #{tpu_custom_call.1} parent=51 // pred_region
            // Predicated region
            $region57: #{tpu_custom_call.1} parent=55 // pred_check
              _
            $region58: #{tpu_custom_call.1} parent=55 // pred_check_branch
              %584 = sbr.rel (0) target = $region60
            $region59: #{tpu_custom_call.1} parent=55 // pred_region
              // Predicated region
              $region79: #{tpu_custom_call.1} parent=59 // pred_check
                _
              $region80: #{tpu_custom_call.1} parent=59 // pred_check_branch
                %635 = sbr.rel (0) target = $region82
              $region81: #{tpu_custom_call.1} parent=59 // pred_region
                %s636 = sshrl.u32 %s575, 1
                // While loop
                $region83: #{tpu_custom_call.1} parent=81 // loop_pre_header
                  _
                $region84: #{tpu_custom_call.1} parent=81 // loop_header
                  %s638 = sphi 0, %s640
                  %p639 = scmp.ge.s32.totalorder %s638, %s636
                  %s643 = sphi 0, %s652
                  %s644 = sphi %s568, %s655
                  %s645 = sphi %s579, %s656
                $region85: #{tpu_custom_call.1} parent=81 // loop_header_branch
                  %642 = sbr.rel (%p639) target = $region89
                $region86: #{tpu_custom_call.1} parent=81 // loop_body
                  %v646 = vld [vmem:[%s644] sm:$0xff]
                  %647 = vst [vmem:[%s645] sm:$0xff] %v646
                  %v648 = vld [vmem:[%s644 + $0x8] sm:$0xff]
                  %649 = vst [vmem:[%s645 + $0x8] sm:$0xff] %v648
                  %s650 = sadd.s32 1, %s643
                  %p651 = scmp.ge.s32.totalorder %s650, %s636
                  %s652 = scalar_select %p651, 0, %s650
                  %s653 = smul.u32 %s652, 16
                  %s654 = smul.u32 %s652, 16
                  %s655 = scalar_lea.vmem %s568, %s653 [#allocation7]
                  %s656 = scalar_lea.vmem %s579, %s654
                $region87: #{tpu_custom_call.1} parent=81 // loop_footer
                  %s640 = sadd.s32 %s638, 1
                $region88: #{tpu_custom_call.1} parent=81 // loop_footer_branch
                  %637 = sbr.rel target = $region84
                $region89: #{tpu_custom_call.1} parent=81 // loop_exit
                  _
                %s657 = sshrl.u32 %s575, 1
                %s658 = sand.u32 %s575, 1
                %s659 = smul.u32 %s657, 2
                %s660 = smul.u32 8, %s659
                %s661 = scalar_lea.vmem %s568, %s660 [#allocation7]
                %s662 = smul.u32 8, %s659
                %s663 = scalar_lea.vmem %s579, %s662
                // While loop
                $region90: #{tpu_custom_call.1} parent=81 // loop_pre_header
                  _
                $region91: #{tpu_custom_call.1} parent=81 // loop_header
                  %s665 = sphi 0, %s667
                  %p666 = scmp.ge.s32.totalorder %s665, %s658
                  %s670 = sphi 0, %s677
                  %s671 = sphi %s661, %s680
                  %s672 = sphi %s663, %s681
                $region92: #{tpu_custom_call.1} parent=81 // loop_header_branch
                  %669 = sbr.rel (%p666) target = $region96
                $region93: #{tpu_custom_call.1} parent=81 // loop_body
                  %v673 = vld [vmem:[%s671] sm:$0xff]
                  %674 = vst [vmem:[%s672] sm:$0xff] %v673
                  %s675 = sadd.s32 1, %s670
                  %p676 = scmp.ge.s32.totalorder %s675, %s658
                  %s677 = scalar_select %p676, 0, %s675
                  %s678 = smul.u32 %s677, 8
                  %s679 = smul.u32 %s677, 8
                  %s680 = scalar_lea.vmem %s661, %s678 [#allocation7]
                  %s681 = scalar_lea.vmem %s663, %s679
                $region94: #{tpu_custom_call.1} parent=81 // loop_footer
                  %s667 = sadd.s32 %s665, 1
                $region95: #{tpu_custom_call.1} parent=81 // loop_footer_branch
                  %664 = sbr.rel target = $region91
                $region96: #{tpu_custom_call.1} parent=81 // loop_exit
                  _
              $region82: #{tpu_custom_call.1} parent=59 // pred_fallthru
                _
              // Predicated region
              $region97: #{tpu_custom_call.1} parent=59 // pred_check
                _
              $region98: #{tpu_custom_call.1} parent=59 // pred_check_branch
                %683 = sbr.rel target = $region100
              $region99: #{tpu_custom_call.1} parent=59 // pred_region
                _
              $region100: #{tpu_custom_call.1} parent=59 // pred_fallthru
                _
            $region60: #{tpu_custom_call.1} parent=55 // pred_fallthru
              _
            // Predicated region
            $region61: #{tpu_custom_call.1} parent=55 // pred_check
              _
            $region62: #{tpu_custom_call.1} parent=55 // pred_check_branch
              %586 = sbr.rel target = $region64
            $region63: #{tpu_custom_call.1} parent=55 // pred_region
              %s588 = sshrl.u32 %s575, 1
              // While loop
              $region65: #{tpu_custom_call.1} parent=63 // loop_pre_header
                _
              $region66: #{tpu_custom_call.1} parent=63 // loop_header
                %s590 = sphi 0, %s592
                %p591 = scmp.ge.s32.totalorder %s590, %s588
                %s595 = sphi 0, %s604
                %s596 = sphi %s568, %s607
                %s597 = sphi %s579, %s608
              $region67: #{tpu_custom_call.1} parent=63 // loop_header_branch
                %594 = sbr.rel (%p591) target = $region71
              $region68: #{tpu_custom_call.1} parent=63 // loop_body
                %v598 = vld [vmem:[%s596] sm:$0xff]
                %599 = vst [vmem:[%s597] sm:$0xff] %v598
                %v600 = vld [vmem:[%s596 + $0x8] sm:$0xff]
                %601 = vst [vmem:[%s597 + $0x8] sm:$0xff] %v600
                %s602 = sadd.s32 1, %s595
                %p603 = scmp.ge.s32.totalorder %s602, %s588
                %s604 = scalar_select %p603, 0, %s602
                %s605 = smul.u32 %s604, 16
                %s606 = smul.u32 %s604, 16
                %s607 = scalar_lea.vmem %s568, %s605 [#allocation7]
                %s608 = scalar_lea.vmem %s579, %s606
              $region69: #{tpu_custom_call.1} parent=63 // loop_footer
                %s592 = sadd.s32 %s590, 1
              $region70: #{tpu_custom_call.1} parent=63 // loop_footer_branch
                %589 = sbr.rel target = $region66
              $region71: #{tpu_custom_call.1} parent=63 // loop_exit
                _
              %s609 = sshrl.u32 %s575, 1
              %s610 = sand.u32 %s575, 1
              %s611 = smul.u32 %s609, 2
              %s612 = smul.u32 8, %s611
              %s613 = scalar_lea.vmem %s568, %s612 [#allocation7]
              %s614 = smul.u32 8, %s611
              %s615 = scalar_lea.vmem %s579, %s614
              // While loop
              $region72: #{tpu_custom_call.1} parent=63 // loop_pre_header
                _
              $region73: #{tpu_custom_call.1} parent=63 // loop_header
                %s617 = sphi 0, %s619
                %p618 = scmp.ge.s32.totalorder %s617, %s610
                %s622 = sphi 0, %s629
                %s623 = sphi %s613, %s632
                %s624 = sphi %s615, %s633
              $region74: #{tpu_custom_call.1} parent=63 // loop_header_branch
                %621 = sbr.rel (%p618) target = $region78
              $region75: #{tpu_custom_call.1} parent=63 // loop_body
                %v625 = vld [vmem:[%s623] sm:$0xff]
                %626 = vst [vmem:[%s624] sm:$0xff] %v625
                %s627 = sadd.s32 1, %s622
                %p628 = scmp.ge.s32.totalorder %s627, %s610
                %s629 = scalar_select %p628, 0, %s627
                %s630 = smul.u32 %s629, 8
                %s631 = smul.u32 %s629, 8
                %s632 = scalar_lea.vmem %s613, %s630 [#allocation7]
                %s633 = scalar_lea.vmem %s615, %s631
              $region76: #{tpu_custom_call.1} parent=63 // loop_footer
                %s619 = sadd.s32 %s617, 1
              $region77: #{tpu_custom_call.1} parent=63 // loop_footer_branch
                %616 = sbr.rel target = $region73
              $region78: #{tpu_custom_call.1} parent=63 // loop_exit
                _
            $region64: #{tpu_custom_call.1} parent=55 // pred_fallthru
              _
          $region56: #{tpu_custom_call.1} parent=51 // pred_fallthru
            _
          %684 = vnop
        $region52: #{tpu_custom_call.1} parent=39 // pred_fallthru
          _
      $region40: #{tpu_custom_call.1} parent=5 // pred_fallthru
        _
      %p685 = scmp.le.s32.totalorder 2, %s17
      // Predicated region
      $region101: #{tpu_custom_call.1} parent=5 // pred_check
        %p686 = pneg %p685
      $region102: #{tpu_custom_call.1} parent=5 // pred_check_branch
        %688 = sbr.rel (%p686) target = $region104
      $region103: #{tpu_custom_call.1} parent=5 // pred_region
        %s689 = ssub.s32 %s17, 2
        // Predicated region
        $region105: #{tpu_custom_call.1} parent=103 // pred_check
          %p690 = pneg %p156
        $region106: #{tpu_custom_call.1} parent=103 // pred_check_branch
          %692 = sbr.rel (%p690) target = $region108
        $region107: #{tpu_custom_call.1} parent=103 // pred_region
          %s693 = sand.u32 %s141, 1
          %s694 = sand.u32 %s141, 1
          %s695 = smul.addr %s694, 16
          %s696 = scalar_lea.vmem [#allocation7], %s695
        $region108: #{tpu_custom_call.1} parent=103 // pred_fallthru
          _
      $region104: #{tpu_custom_call.1} parent=5 // pred_fallthru
        _
    $region6: #{tpu_custom_call.1} parent=1 // loop_footer
      %s21 = sadd.s32 1, %s17
    $region7: #{tpu_custom_call.1} parent=1 // loop_footer_branch
      %16 = sbr.rel target = $region3
    $region8: #{tpu_custom_call.1} parent=1 // loop_exit
      _
    %697 = vsyncpa [#allocation4], 1
    %s698 = scalar_lea.sflag [#allocation4], 1
    %699 = vsyncpa %s698, 1
    %700 = vsyncpa [#allocation6], 1

// kernel: tpu_custom_call.1
$region0: #{tpu_custom_call.1}
  #allocation0 [shape = 'u32[]', space=smem, size = 0x4, offset = 0x4, fixed_abs, tag = 'smem constant byte address 0x4 - core index']
  #allocation1 [shape = 'u32[144,128]{1,0:T(1,128)}', space=vmem, size = 0x12000, scoped, tag = 'internal scratch']
  #allocation2 [shape = 'f32[1,1]{1,0:T(1,128)S(1)}', space=vmem, size = 0x200, scoped, tag = 'scoped memory for tpu_custom_call.1']
  %s0 = inlined_call_operand.hbm [shape: f32[37,256], index: 0, kind: input, shape index: {}]
  %s1 = inlined_call_operand.hbm [shape: bf16[256,256], index: 1, kind: input, shape index: {}]
  %s2 = inlined_call_operand.vmem [shape: f32[1,256], index: 2, kind: input, shape index: {}]
  %s3 = inlined_call_operand.vmem [shape: f32[1,128], index: 3, kind: input, shape index: {}]
  %s4 = inlined_call_operand.<no memory space> [shape: f32[1,1], index: 4, kind: input, shape index: {}]
  %s5 = inlined_call_operand.vmem [shape: f32[37,1], index: 5, kind: output, shape index: {}]
  %s6 = sld [smem:[#allocation0]]
  $region109: #{tpu_custom_call.1} parent=0
    _
  %s8 = ssub.s32 1, %s6
  %s9 = scalar_select 0, %s8, %s6
  %v10 = vstv %s4
  %11 = vst [vmem:[#allocation2] sm:$0x1] %v10
  $region1: #{tpu_custom_call.1} parent=0
    #allocation3 [shape = 'u8[32768]{0}', space=vmem, size = 0x8000, scoped, tag = 'input window, operand 0']
    #allocation4 [shape = 's32[2]{0}', space=sflag, size = 0x8, scoped, tag = 'scoped memory for tpu_custom_call.1']
    #allocation5 [shape = 'u8[131072]{0}', space=vmem, size = 0x20000, scoped, tag = 'input window, operand 1, single buffered']
    #allocation6 [shape = 's32[1]{0}', space=sflag, size = 0x4, scoped, tag = 'scoped memory for tpu_custom_call.1']
    #allocation7 [shape = 'u8[16384]{0}', space=vmem, size = 0x4000, scoped, tag = 'output window, operand 0']
    %12 = vsyncpa [#allocation4], 0
    %s13 = scalar_lea.sflag [#allocation4], 1
    %14 = vsyncpa %s13, 0
    %15 = vsyncpa [#allocation6], 0
    loop: start=0, step=1, limit=5
    $region2: #{tpu_custom_call.1} parent=1 // loop_pre_header
      _
    $region3: #{tpu_custom_call.1} parent=1 // loop_header
      %s17 = sphi 0, %s21
      %p18 = scmp.ge.s32.totalorder %s17, 5
      %s27 = sphi 0, %s29
      %s30 = sphi 0, %s27
      %s31 = sphi 0, %s30
      %s47 = sphi 0, %s31
      %s51 = sphi 0, %s51
      %s53 = sphi 0, %s51
      %s54 = sphi 0, %s53
      %s68 = sphi 0, %s54
      %s72 = sphi 0, %s72
      %s74 = sphi 0, %s72
      %s75 = sphi 0, %s74
      %s89 = sphi 0, %s75
      %s93 = sphi 0, %s93
      %s95 = sphi 0, %s93
      %s96 = sphi 0, %s95
      %s110 = sphi 0, %s96
      %s114 = sphi 0, %s114
      %s116 = sphi 0, %s114
      %s117 = sphi 0, %s116
      %s131 = sphi 0, %s117
      %s137 = sphi 0, %s139
      %s140 = sphi 0, %s137
      %s141 = sphi 0, %s140
      %s157 = sphi 0, %s141
    $region4: #{tpu_custom_call.1} parent=1 // loop_header_branch
      %20 = sbr.rel (%p18) target = $region8
    $region5: #{tpu_custom_call.1} parent=1 // loop_body
      %s22 = ssub.s32 %s17, 1
      %s23 = ssub.s32 %s17, 2
      %s24 = sadd.s32 %s17, 1
      %s25 = ssub.s32 %s17, %s24
      %p26 = scmp.eq.s32.totalorder %s25, 0
      %s28 = sadd.s32 %s27, 1
      %s29 = scalar_select %p26, %s27, %s28
      %p32 = pneg %p26
      %p33 = scmp.eq.s32.totalorder %s17, 2
      %p34 = por %p32, %p33
      %p35 = scmp.ne.s32.totalorder %s27, %s30
      %p36 = scmp.eq.s32.totalorder %s17, 0
      %p37 = por %p35, %p36
      %p38 = scmp.ne.s32.totalorder %s27, %s30
      %p39 = scmp.eq.s32.totalorder %s22, 2
      %p40 = por %p38, %p39
      %p41 = scmp.ne.s32.totalorder %s30, %s31
      %p42 = scmp.eq.s32.totalorder %s22, 0
      %p43 = por %p41, %p42
      %p44 = scmp.ne.s32.totalorder %s30, %s31
      %p45 = scmp.eq.s32.totalorder %s23, 2
      %p46 = por %p44, %p45
      %p48 = scmp.ne.s32.totalorder %s31, %s47
      %p49 = scmp.eq.s32.totalorder %s23, 0
      %p50 = por %p48, %p49
      %s52 = sadd.s32 %s51, 1
      %p55 = scmp.eq.s32.totalorder %s17, 2
      %p56 = scmp.ne.s32.totalorder %s51, %s53
      %p57 = scmp.eq.s32.totalorder %s17, 0
      %p58 = por %p56, %p57
      %p59 = scmp.ne.s32.totalorder %s51, %s53
      %p60 = scmp.eq.s32.totalorder %s22, 2
      %p61 = por %p59, %p60
      %p62 = scmp.ne.s32.totalorder %s53, %s54
      %p63 = scmp.eq.s32.totalorder %s22, 0
      %p64 = por %p62, %p63
      %p65 = scmp.ne.s32.totalorder %s53, %s54
      %p66 = scmp.eq.s32.totalorder %s23, 2
      %p67 = por %p65, %p66
      %p69 = scmp.ne.s32.totalorder %s54, %s68
      %p70 = scmp.eq.s32.totalorder %s23, 0
      %p71 = por %p69, %p70
      %s73 = sadd.s32 %s72, 1
      %p76 = scmp.eq.s32.totalorder %s17, 2
      %p77 = scmp.ne.s32.totalorder %s72, %s74
      %p78 = scmp.eq.s32.totalorder %s17, 0
      %p79 = por %p77, %p78
      %p80 = scmp.ne.s32.totalorder %s72, %s74
      %p81 = scmp.eq.s32.totalorder %s22, 2
      %p82 = por %p80, %p81
      %p83 = scmp.ne.s32.totalorder %s74, %s75
      %p84 = scmp.eq.s32.totalorder %s22, 0
      %p85 = por %p83, %p84
      %p86 = scmp.ne.s32.totalorder %s74, %s75
      %p87 = scmp.eq.s32.totalorder %s23, 2
      %p88 = por %p86, %p87
      %p90 = scmp.ne.s32.totalorder %s75, %s89
      %p91 = scmp.eq.s32.totalorder %s23, 0
      %p92 = por %p90, %p91
      %s94 = sadd.s32 %s93, 1
      %p97 = scmp.eq.s32.totalorder %s17, 2
      %p98 = scmp.ne.s32.totalorder %s93, %s95
      %p99 = scmp.eq.s32.totalorder %s17, 0
      %p100 = por %p98, %p99
      %p101 = scmp.ne.s32.totalorder %s93, %s95
      %p102 = scmp.eq.s32.totalorder %s22, 2
      %p103 = por %p101, %p102
      %p104 = scmp.ne.s32.totalorder %s95, %s96
      %p105 = scmp.eq.s32.totalorder %s22, 0
      %p106 = por %p104, %p105
      %p107 = scmp.ne.s32.totalorder %s95, %s96
      %p108 = scmp.eq.s32.totalorder %s23, 2
      %p109 = por %p107, %p108
      %p111 = scmp.ne.s32.totalorder %s96, %s110
      %p112 = scmp.eq.s32.totalorder %s23, 0
      %p113 = por %p111, %p112
      %s115 = sadd.s32 %s114, 1
      %p118 = scmp.eq.s32.totalorder %s17, 2
      %p119 = scmp.ne.s32.totalorder %s114, %s116
      %p120 = scmp.eq.s32.totalorder %s17, 0
      %p121 = por %p119, %p120
      %p122 = scmp.ne.s32.totalorder %s114, %s116
      %p123 = scmp.eq.s32.totalorder %s22, 2
      %p124 = por %p122, %p123
      %p125 = scmp.ne.s32.totalorder %s116, %s117
      %p126 = scmp.eq.s32.totalorder %s22, 0
      %p127 = por %p125, %p126
      %p128 = scmp.ne.s32.totalorder %s116, %s117
      %p129 = scmp.eq.s32.totalorder %s23, 2
      %p130 = por %p128, %p129
      %p132 = scmp.ne.s32.totalorder %s117, %s131
      %p133 = scmp.eq.s32.totalorder %s23, 0
      %p134 = por %p132, %p133
      %s135 = ssub.s32 %s17, %s24
      %p136 = scmp.eq.s32.totalorder %s135, 0
      %s138 = sadd.s32 %s137, 1
      %s139 = scalar_select %p136, %s137, %s138
      %p142 = pneg %p136
      %p143 = scmp.eq.s32.totalorder %s17, 2
      %p144 = por %p142, %p143
      %p145 = scmp.ne.s32.totalorder %s137, %s140
      %p146 = scmp.eq.s32.totalorder %s17, 0
      %p147 = por %p145, %p146
      %p148 = scmp.ne.s32.totalorder %s137, %s140
      %p149 = scmp.eq.s32.totalorder %s22, 2
      %p150 = por %p148, %p149
      %p151 = scmp.ne.s32.totalorder %s140, %s141
      %p152 = scmp.eq.s32.totalorder %s22, 0
      %p153 = por %p151, %p152
      %p154 = scmp.ne.s32.totalorder %s140, %s141
      %p155 = scmp.eq.s32.totalorder %s23, 2
      %p156 = por %p154, %p155
      %p158 = scmp.ne.s32.totalorder %s141, %s157
      %p159 = scmp.eq.s32.totalorder %s23, 0
      %p160 = por %p158, %p159
      %p161 = scmp.le.s32.totalorder 1, %s17
      %p162 = scmp.lt.s32.totalorder %s17, 4
      %p163 = pnand %p161, %p162
      %p164 = pneg %p163
      // Predicated region
      $region9: #{tpu_custom_call.1} parent=5 // pred_check
        _
      $region10: #{tpu_custom_call.1} parent=5 // pred_check_branch
        %166 = sbr.rel (%p163) target = $region12
      $region11: #{tpu_custom_call.1} parent=5 // pred_region
        %s167 = ssub.s32 %s17, 1
        // Predicated region
        $region13: #{tpu_custom_call.1} parent=11 // pred_check
          %p168 = pneg %p64
        $region14: #{tpu_custom_call.1} parent=11 // pred_check_branch
          %170 = sbr.rel (%p168) target = $region16
        $region15: #{tpu_custom_call.1} parent=11 // pred_region
          %s172 = ssub.s32 4096, 4096
          %173 = vsyncadd [#allocation6], %s172
          %s174 = sshll.u32 [#allocation5], 4
          %s175 = int_to_ptr.vmem [resolvable:$true] %s174
          %180 = dma.hbm_to_vmem [thread:$0]  %s1, 4096, %s175, [#allocation6], 128, 128, 8
        $region16: #{tpu_custom_call.1} parent=11 // pred_fallthru
          _
        // Predicated region
        $region17: #{tpu_custom_call.1} parent=11 // pred_check
          %p181 = pneg %p85
        $region18: #{tpu_custom_call.1} parent=11 // pred_check_branch
          %183 = sbr.rel (%p181) target = $region20
        $region19: #{tpu_custom_call.1} parent=11 // pred_region
          _
        $region20: #{tpu_custom_call.1} parent=11 // pred_fallthru
          _
        // Predicated region
        $region21: #{tpu_custom_call.1} parent=11 // pred_check
          %p184 = pneg %p106
        $region22: #{tpu_custom_call.1} parent=11 // pred_check_branch
          %186 = sbr.rel (%p184) target = $region24
        $region23: #{tpu_custom_call.1} parent=11 // pred_region
          _
        $region24: #{tpu_custom_call.1} parent=11 // pred_fallthru
          _
        // Predicated region
        $region25: #{tpu_custom_call.1} parent=11 // pred_check
          %p187 = pneg %p127
        $region26: #{tpu_custom_call.1} parent=11 // pred_check_branch
          %189 = sbr.rel (%p187) target = $region28
        $region27: #{tpu_custom_call.1} parent=11 // pred_region
          _
        $region28: #{tpu_custom_call.1} parent=11 // pred_fallthru
          _
      $region12: #{tpu_custom_call.1} parent=5 // pred_fallthru
        _
      %p190 = scmp.lt.s32.totalorder %s17, 3
      // Predicated region
      $region29: #{tpu_custom_call.1} parent=5 // pred_check
        %p191 = pneg %p190
      $region30: #{tpu_custom_call.1} parent=5 // pred_check_branch
        %193 = sbr.rel (%p191) target = $region32
      $region31: #{tpu_custom_call.1} parent=5 // pred_region
        // Predicated region
        $region33: #{tpu_custom_call.1} parent=31 // pred_check
          %p194 = pneg %p37
        $region34: #{tpu_custom_call.1} parent=31 // pred_check_branch
          %196 = sbr.rel (%p194) target = $region36
        $region35: #{tpu_custom_call.1} parent=31 // pred_region
          %s197 = sand.u32 %s27, 1
          %s198 = scalar_lea.sflag [#allocation4], %s197
          %s199 = sand.u32 %s27, 1
          %s200 = smul.addr %s199, 32
          %s201 = scalar_lea.vmem [#allocation3], %s200
          %s202 = smul.u32 2, %s17
          %s203 = ssub.s32 5, %s202
          %p204 = scmp.lt.s32.totalorder %s203, 2
          %s205 = scalar_select %p204, %s203, 2
          %s206 = smul.u32 128, %s205
          %s207 = smul.u32 %s206, 2
          %s209 = ssub.s32 512, %s207
          %210 = vsyncadd %s198, %s209
          %p211 = scmp.ne.s32.totalorder 0, %s207
          %s212 = smul.addr %s202, 2
          %s213 = smul.addr %s212, 128
          %s214 = scalar_lea.hbm %s0, %s213
          %s215 = smul.u32 16, %s205
          %s216 = sshll.u32 %s201, 4
          %s217 = int_to_ptr.vmem [resolvable:$true] %s216
          %s218 = sshll.u32 %s215, 4
          %222 = dma.hbm_to_vmem [thread:$0]  (%p211), %s214, %s218, %s217, %s198, 256, 256, 16
        $region36: #{tpu_custom_call.1} parent=31 // pred_fallthru
          _
      $region32: #{tpu_custom_call.1} parent=5 // pred_fallthru
        _
      %p223 = scmp.le.s32.totalorder 1, %s17
      %p224 = scmp.lt.s32.totalorder %s17, 4
      %p225 = pnand %p223, %p224
      %p226 = pneg %p225
      // Predicated region
      $region37: #{tpu_custom_call.1} parent=5 // pred_check
        _
      $region38: #{tpu_custom_call.1} parent=5 // pred_check_branch
        %228 = sbr.rel (%p225) target = $region40
      $region39: #{tpu_custom_call.1} parent=5 // pred_region
        %s229 = ssub.s32 %s17, 1
        %s230 = sand.u32 %s30, 1
        %s231 = scalar_lea.sflag [#allocation4], %s230
        %s232 = sand.u32 %s30, 1
        %s233 = smul.addr %s232, 32
        %s234 = scalar_lea.vmem [#allocation3], %s233
        // Predicated region
        $region41: #{tpu_custom_call.1} parent=39 // pred_check
          %p235 = pneg %p43
        $region42: #{tpu_custom_call.1} parent=39 // pred_check_branch
          %237 = sbr.rel (%p235) target = $region44
        $region43: #{tpu_custom_call.1} parent=39 // pred_region
          %238 = dma.done %s231, 512
        $region44: #{tpu_custom_call.1} parent=39 // pred_fallthru
          _
        // Predicated region
        $region45: #{tpu_custom_call.1} parent=39 // pred_check
          %p239 = pneg %p64
        $region46: #{tpu_custom_call.1} parent=39 // pred_check_branch
          %241 = sbr.rel (%p239) target = $region48
        $region47: #{tpu_custom_call.1} parent=39 // pred_region
          %242 = dma.done [#allocation6], 4096
        $region48: #{tpu_custom_call.1} parent=39 // pred_fallthru
          _
        %s243 = sand.u32 %s30, 1
        %s244 = scalar_lea.sflag [#allocation4], %s243
        %s245 = sand.u32 %s30, 1
        %s246 = smul.addr %s245, 32
        %s247 = scalar_lea.vmem [#allocation3], %s246
        %p248 = pneg %p43
        %p249 = pneg %p40
        %p250 = pneg %p64
        %p251 = pneg %p61
        %p252 = pneg %p85
        %p253 = pneg %p82
        %p254 = pneg %p106
        %p255 = pneg %p103
        %p256 = pneg %p127
        %p257 = pneg %p124
        %p258 = pneg %p153
        %p259 = pneg %p150
        %s260 = sand.u32 %s140, 1
        %s261 = sand.u32 %s140, 1
        %s262 = smul.addr %s261, 16
        %s263 = scalar_lea.vmem [#allocation7], %s262
        %s264 = smul.u32 2, %s22
        %s265 = ssub.s32 5, %s264
        %p266 = scmp.lt.s32.totalorder %s265, 2
        %s267 = scalar_select %p266, %s265, 2
        %s268 = smul.u32 128, %s267
        %s269 = smul.u32 %s268, 2
        %s270 = smul.u32 2, %s22
        %s271 = ssub.s32 5, %s270
        %p272 = scmp.lt.s32.totalorder %s271, 2
        %s273 = scalar_select %p272, %s271, 2
        %s274 = smul.u32 128, %s273
        %v275 = vld [vmem:[%s234] sm:$0xff]
        %v276 = vld [vmem:[%s234 + $0x8] sm:$0xff]
        %v277 = vld [vmem:[%s234 + $0x10] sm:$0xff]
        %v278 = vld [vmem:[%s234 + $0x18] sm:$0xff]
        %v279 = vpack.c.bf16 %v277, %v275
        %v280 = vpack.c.bf16 %v278, %v276
        %v281 = vld [vmem:[#allocation5] sm:$0xff]
        %v282 = vld [vmem:[#allocation5 + $0x8] sm:$0xff]
        %v283 = vld [vmem:[#allocation5 + $0x10] sm:$0xff]
        %v284 = vld [vmem:[#allocation5 + $0x18] sm:$0xff]
        %v285 = vld [vmem:[#allocation5 + $0x20] sm:$0xff]
        %v286 = vld [vmem:[#allocation5 + $0x28] sm:$0xff]
        %v287 = vld [vmem:[#allocation5 + $0x30] sm:$0xff]
        %v288 = vld [vmem:[#allocation5 + $0x38] sm:$0xff]
        %v289 = vld [vmem:[#allocation5 + $0x40] sm:$0xff]
        %v290 = vld [vmem:[#allocation5 + $0x48] sm:$0xff]
        %v291 = vld [vmem:[#allocation5 + $0x50] sm:$0xff]
        %v292 = vld [vmem:[#allocation5 + $0x58] sm:$0xff]
        %v293 = vld [vmem:[#allocation5 + $0x60] sm:$0xff]
        %v294 = vld [vmem:[#allocation5 + $0x68] sm:$0xff]
        %v295 = vld [vmem:[#allocation5 + $0x70] sm:$0xff]
        %v296 = vld [vmem:[#allocation5 + $0x78] sm:$0xff]
        %v297 = vld [vmem:[#allocation5 + $0x80] sm:$0xff]
        %v298 = vld [vmem:[#allocation5 + $0x88] sm:$0xff]
        %v299 = vld [vmem:[#allocation5 + $0x90] sm:$0xff]
        %v300 = vld [vmem:[#allocation5 + $0x98] sm:$0xff]
        %v301 = vld [vmem:[#allocation5 + $0xa0] sm:$0xff]
        %v302 = vld [vmem:[#allocation5 + $0xa8] sm:$0xff]
        %v303 = vld [vmem:[#allocation5 + $0xb0] sm:$0xff]
        %v304 = vld [vmem:[#allocation5 + $0xb8] sm:$0xff]
        %v305 = vld [vmem:[#allocation5 + $0xc0] sm:$0xff]
        %v306 = vld [vmem:[#allocation5 + $0xc8] sm:$0xff]
        %v307 = vld [vmem:[#allocation5 + $0xd0] sm:$0xff]
        %v308 = vld [vmem:[#allocation5 + $0xd8] sm:$0xff]
        %v309 = vld [vmem:[#allocation5 + $0xe0] sm:$0xff]
        %v310 = vld [vmem:[#allocation5 + $0xe8] sm:$0xff]
        %v311 = vld [vmem:[#allocation5 + $0xf0] sm:$0xff]
        %v312 = vld [vmem:[#allocation5 + $0xf8] sm:$0xff]
        %v313 = vld [vmem:[%s2] sm:$0x3]
        %v315 = vlaneseq
        %v316 = vshrl.u32 %v315, 7
        %v317 = vsub.s32 0, %v316
        %v318 = vrot.slane %v313, %v317
        %v319 = vlaneseq
        %v320 = vshrl.u32 %v319, 7
        %v321 = vsub.s32 1, %v320
        %v322 = vrot.slane %v313, %v321
        %v357 = vunpack.c.l.b16 %v281
        %v358 = vunpack.c.h.b16 %v281
        %v359 = vunpack.c.l.b16 %v282
        %v360 = vunpack.c.h.b16 %v282
        %v361 = vunpack.c.l.b16 %v283
        %v362 = vunpack.c.h.b16 %v283
        %v363 = vunpack.c.l.b16 %v284
        %v364 = vunpack.c.h.b16 %v284
        %v365 = vunpack.c.l.b16 %v285
        %v366 = vunpack.c.h.b16 %v285
        %v367 = vunpack.c.l.b16 %v286
        %v368 = vunpack.c.h.b16 %v286
        %v369 = vunpack.c.l.b16 %v287
        %v370 = vunpack.c.h.b16 %v287
        %v371 = vunpack.c.l.b16 %v288
        %v372 = vunpack.c.h.b16 %v288
        %v373 = vunpack.c.l.b16 %v289
        %v374 = vunpack.c.h.b16 %v289
        %v375 = vunpack.c.l.b16 %v290
        %v376 = vunpack.c.h.b16 %v290
        %v377 = vunpack.c.l.b16 %v291
        %v378 = vunpack.c.h.b16 %v291
        %v379 = vunpack.c.l.b16 %v292
        %v380 = vunpack.c.h.b16 %v292
        %v381 = vunpack.c.l.b16 %v293
        %v382 = vunpack.c.h.b16 %v293
        %v383 = vunpack.c.l.b16 %v294
        %v384 = vunpack.c.h.b16 %v294
        %v385 = vunpack.c.l.b16 %v295
        %v386 = vunpack.c.h.b16 %v295
        %v387 = vunpack.c.l.b16 %v296
        %v388 = vunpack.c.h.b16 %v296
        %v389 = vunpack.c.l.b16 %v297
        %v390 = vunpack.c.h.b16 %v297
        %v391 = vunpack.c.l.b16 %v298
        %v392 = vunpack.c.h.b16 %v298
        %v393 = vunpack.c.l.b16 %v299
        %v394 = vunpack.c.h.b16 %v299
        %v395 = vunpack.c.l.b16 %v300
        %v396 = vunpack.c.h.b16 %v300
        %v397 = vunpack.c.l.b16 %v301
        %v398 = vunpack.c.h.b16 %v301
        %v399 = vunpack.c.l.b16 %v302
        %v400 = vunpack.c.h.b16 %v302
        %v401 = vunpack.c.l.b16 %v303
        %v402 = vunpack.c.h.b16 %v303
        %v403 = vunpack.c.l.b16 %v304
        %v404 = vunpack.c.h.b16 %v304
        %v405 = vunpack.c.l.b16 %v305
        %v406 = vunpack.c.h.b16 %v305
        %v407 = vunpack.c.l.b16 %v306
        %v408 = vunpack.c.h.b16 %v306
        %v409 = vunpack.c.l.b16 %v307
        %v410 = vunpack.c.h.b16 %v307
        %v411 = vunpack.c.l.b16 %v308
        %v412 = vunpack.c.h.b16 %v308
        %v413 = vunpack.c.l.b16 %v309
        %v414 = vunpack.c.h.b16 %v309
        %v415 = vunpack.c.l.b16 %v310
        %v416 = vunpack.c.h.b16 %v310
        %v417 = vunpack.c.l.b16 %v311
        %v418 = vunpack.c.h.b16 %v311
        %v419 = vunpack.c.l.b16 %v312
        %v420 = vunpack.c.h.b16 %v312
        %v421 = vpack.c.b16 %v359, %v357
        %v422 = vpack.c.b16 %v360, %v358
        %v423 = vpack.c.b16 %v363, %v361
        %v424 = vpack.c.b16 %v364, %v362
        %v425 = vpack.c.b16 %v367, %v365
        %v426 = vpack.c.b16 %v368, %v366
        %v427 = vpack.c.b16 %v371, %v369
        %v428 = vpack.c.b16 %v372, %v370
        %v429 = vpack.c.b16 %v375, %v373
        %v430 = vpack.c.b16 %v376, %v374
        %v431 = vpack.c.b16 %v379, %v377
        %v432 = vpack.c.b16 %v380, %v378
        %v433 = vpack.c.b16 %v383, %v381
        %v434 = vpack.c.b16 %v384, %v382
        %v435 = vpack.c.b16 %v387, %v385
        %v436 = vpack.c.b16 %v388, %v386
        %v437 = vpack.c.b16 %v391, %v389
        %v438 = vpack.c.b16 %v392, %v390
        %v439 = vpack.c.b16 %v395, %v393
        %v440 = vpack.c.b16 %v396, %v394
        %v441 = vpack.c.b16 %v399, %v397
        %v442 = vpack.c.b16 %v400, %v398
        %v443 = vpack.c.b16 %v403, %v401
        %v444 = vpack.c.b16 %v404, %v402
        %v445 = vpack.c.b16 %v407, %v405
        %v446 = vpack.c.b16 %v408, %v406
        %v447 = vpack.c.b16 %v411, %v409
        %v448 = vpack.c.b16 %v412, %v410
        %v449 = vpack.c.b16 %v415, %v413
        %v450 = vpack.c.b16 %v416, %v414
        %v451 = vpack.c.b16 %v419, %v417
        %v452 = vpack.c.b16 %v420, %v418
        %485 = vmatprep.subr.bf16.mxu0 %v422
        %486 = vmatpush1.bf16.msra.mxu0 %v421
        %487 = vmatprep.subr.bf16.mxu0 %v424
        %488 = vmatpush1.bf16.msra.mxu0 %v423
        %489 = vmatprep.subr.bf16.mxu0 %v426
        %490 = vmatpush1.bf16.msra.mxu0 %v425
        %491 = vmatprep.subr.bf16.mxu0 %v428
        %492 = vmatpush1.bf16.msra.mxu0 %v427
        %493 = vmatprep.subr.bf16.mxu0 %v430
        %494 = vmatpush1.bf16.msra.mxu0 %v429
        %495 = vmatprep.subr.bf16.mxu0 %v432
        %496 = vmatpush1.bf16.msra.mxu0 %v431
        %497 = vmatprep.subr.bf16.mxu0 %v434
        %498 = vmatpush1.bf16.msra.mxu0 %v433
        %499 = vmatprep.subr.bf16.mxu0 %v436
        %500 = vmatpush1.bf16.msra.mxu0 %v435
        %501 = vmatprep.subr.bf16.mxu0 %v438
        %502 = vmatpush1.bf16.msra.mxu0 %v437
        %503 = vmatprep.subr.bf16.mxu0 %v440
        %504 = vmatpush1.bf16.msra.mxu0 %v439
        %505 = vmatprep.subr.bf16.mxu0 %v442
        %506 = vmatpush1.bf16.msra.mxu0 %v441
        %507 = vmatprep.subr.bf16.mxu0 %v444
        %508 = vmatpush1.bf16.msra.mxu0 %v443
        %509 = vmatprep.subr.bf16.mxu0 %v446
        %510 = vmatpush1.bf16.msra.mxu0 %v445
        %511 = vmatprep.subr.bf16.mxu0 %v448
        %512 = vmatpush1.bf16.msra.mxu0 %v447
        %513 = vmatprep.subr.bf16.mxu0 %v450
        %514 = vmatpush1.bf16.msra.mxu0 %v449
        %515 = vmatprep.subr.bf16.mxu0 %v452
        %516 = vmatpush1.bf16.msra.mxu0 %v451
        %517 = vmatprep.mubr.bf16.mxu0 %v280
        %518 = vmatmul.mubr.bf16.gmra.mrb[0].mxu0 %v279
        %v519 = vpop.f32.mrb[0].mxu0
        %v520 = vadd.f32 %v318, %v519
        %v521 = vpop.f32.mrb[0].mxu0
        %v522 = vadd.f32 %v322, %v521
        %v523 = vpop.f32.mrb[0].mxu0
        %v524 = vadd.f32 %v318, %v523
        %v525 = vpop.f32.mrb[0].mxu0
        %v526 = vadd.f32 %v322, %v525
        %527 = vdwg.mxu0
        %v528 = vtanh.pop %v520
        %v529 = vtanh.pop %v524
        %v530 = vmul.f32 %v522, 0.5
        %v531 = vmul.f32 %v526, 0.5
        %v532 = vtanh.pop %v530
        %v533 = vtanh.pop %v531
        %v534 = vadd.f32 %v532, 1.0
        %v535 = vadd.f32 %v533, 1.0
        %v536 = vmul.f32 %v534, 0.5
        %v537 = vmul.f32 %v535, 0.5
        %v538 = vmul.f32 %v528, %v536
        %v539 = vmul.f32 %v529, %v537
        %v540 = vld [vmem:[%s3] sm:$0x1]
        %v542 = vlaneseq
        %v543 = vshrl.u32 %v542, 7
        %v544 = vsub.s32 0, %v543
        %v545 = vrot.slane %v540, %v544
        %v547 = vmul.f32 %v538, %v545
        %v548 = vmul.f32 %v539, %v545
        %549 = vadd.xlane.f32.xlu0 %v547
        %v550 = vpop.xlane.xlu0 %549
        %551 = vadd.xlane.f32.xlu0 %v548
        %v552 = vpop.xlane.xlu0 %551
        %v553 = vld [vmem:[#allocation2] sm:$0x1]
        %v555 = vlaneseq
        %v556 = vshrl.u32 %v555, 7
        %v557 = vsub.s32 0, %v556
        %v558 = vrot.slane %v553, %v557
        %v560 = vadd.f32 %v550, %v558
        %v561 = vadd.f32 %v552, %v558
        %vm562 = vcmask 7168
        %563 = vst.msk [vmem:[%s263] sm:$0xff] %vm562, %v560
        %564 = vst.msk [vmem:[%s263 + $0x8] sm:$0xff] %vm562, %v561
        %s565 = sand.u32 %s140, 1
        %s566 = sand.u32 %s140, 1
        %s567 = smul.addr %s566, 16
        %s568 = scalar_lea.vmem [#allocation7], %s567
        // Predicated region
        $region49: #{tpu_custom_call.1} parent=39 // pred_check
          %p569 = pneg %p150
        $region50: #{tpu_custom_call.1} parent=39 // pred_check_branch
          %571 = sbr.rel (%p569) target = $region52
        $region51: #{tpu_custom_call.1} parent=39 // pred_region
          %s572 = smul.u32 2, %s22
          %s573 = ssub.s32 5, %s572
          %p574 = scmp.lt.s32.totalorder %s573, 2
          %s575 = scalar_select %p574, %s573, 2
          %s576 = smul.u32 128, %s575
          %p577 = scmp.ne.s32.totalorder 0, %s576
          %s578 = smul.addr %s572, 8
          %s579 = scalar_lea.vmem %s5, %s578
          // Predicated region
          $region53: #{tpu_custom_call.1} parent=51 // pred_check
            %p580 = pneg %p577
          $region54: #{tpu_custom_call.1} parent=51 // pred_check_branch
            %582 = sbr.rel (%p580) target = $region56
          $region55: #{tpu_custom_call.1} parent=51 // pred_region
            // Predicated region
            $region57: #{tpu_custom_call.1} parent=55 // pred_check
              _
            $region58: #{tpu_custom_call.1} parent=55 // pred_check_branch
              %584 = sbr.rel (0) target = $region60
            $region59: #{tpu_custom_call.1} parent=55 // pred_region
              // Predicated region
              $region79: #{tpu_custom_call.1} parent=59 // pred_check
                _
              $region80: #{tpu_custom_call.1} parent=59 // pred_check_branch
                %635 = sbr.rel (0) target = $region82
              $region81: #{tpu_custom_call.1} parent=59 // pred_region
                %s636 = sshrl.u32 %s575, 1
                // While loop
                $region83: #{tpu_custom_call.1} parent=81 // loop_pre_header
                  _
                $region84: #{tpu_custom_call.1} parent=81 // loop_header
                  %s638 = sphi 0, %s640
                  %p639 = scmp.ge.s32.totalorder %s638, %s636
                  %s643 = sphi 0, %s652
                  %s644 = sphi %s568, %s655
                  %s645 = sphi %s579, %s656
                $region85: #{tpu_custom_call.1} parent=81 // loop_header_branch
                  %642 = sbr.rel (%p639) target = $region89
                $region86: #{tpu_custom_call.1} parent=81 // loop_body
                  %v646 = vld [vmem:[%s644] sm:$0xff]
                  %647 = vst [vmem:[%s645] sm:$0xff] %v646
                  %v648 = vld [vmem:[%s644 + $0x8] sm:$0xff]
                  %649 = vst [vmem:[%s645 + $0x8] sm:$0xff] %v648
                  %s650 = sadd.s32 1, %s643
                  %p651 = scmp.ge.s32.totalorder %s650, %s636
                  %s652 = scalar_select %p651, 0, %s650
                  %s653 = smul.u32 %s652, 16
                  %s654 = smul.u32 %s652, 16
                  %s655 = scalar_lea.vmem %s568, %s653 [#allocation7]
                  %s656 = scalar_lea.vmem %s579, %s654
                $region87: #{tpu_custom_call.1} parent=81 // loop_footer
                  %s640 = sadd.s32 %s638, 1
                $region88: #{tpu_custom_call.1} parent=81 // loop_footer_branch
                  %637 = sbr.rel target = $region84
                $region89: #{tpu_custom_call.1} parent=81 // loop_exit
                  _
                %s657 = sshrl.u32 %s575, 1
                %s658 = sand.u32 %s575, 1
                %s659 = smul.u32 %s657, 2
                %s660 = smul.u32 8, %s659
                %s661 = scalar_lea.vmem %s568, %s660 [#allocation7]
                %s662 = smul.u32 8, %s659
                %s663 = scalar_lea.vmem %s579, %s662
                // While loop
                $region90: #{tpu_custom_call.1} parent=81 // loop_pre_header
                  _
                $region91: #{tpu_custom_call.1} parent=81 // loop_header
                  %s665 = sphi 0, %s667
                  %p666 = scmp.ge.s32.totalorder %s665, %s658
                  %s670 = sphi 0, %s677
                  %s671 = sphi %s661, %s680
                  %s672 = sphi %s663, %s681
                $region92: #{tpu_custom_call.1} parent=81 // loop_header_branch
                  %669 = sbr.rel (%p666) target = $region96
                $region93: #{tpu_custom_call.1} parent=81 // loop_body
                  %v673 = vld [vmem:[%s671] sm:$0xff]
                  %674 = vst [vmem:[%s672] sm:$0xff] %v673
                  %s675 = sadd.s32 1, %s670
                  %p676 = scmp.ge.s32.totalorder %s675, %s658
                  %s677 = scalar_select %p676, 0, %s675
                  %s678 = smul.u32 %s677, 8
                  %s679 = smul.u32 %s677, 8
                  %s680 = scalar_lea.vmem %s661, %s678 [#allocation7]
                  %s681 = scalar_lea.vmem %s663, %s679
                $region94: #{tpu_custom_call.1} parent=81 // loop_footer
                  %s667 = sadd.s32 %s665, 1
                $region95: #{tpu_custom_call.1} parent=81 // loop_footer_branch
                  %664 = sbr.rel target = $region91
                $region96: #{tpu_custom_call.1} parent=81 // loop_exit
                  _
              $region82: #{tpu_custom_call.1} parent=59 // pred_fallthru
                _
              // Predicated region
              $region97: #{tpu_custom_call.1} parent=59 // pred_check
                _
              $region98: #{tpu_custom_call.1} parent=59 // pred_check_branch
                %683 = sbr.rel target = $region100
              $region99: #{tpu_custom_call.1} parent=59 // pred_region
                _
              $region100: #{tpu_custom_call.1} parent=59 // pred_fallthru
                _
            $region60: #{tpu_custom_call.1} parent=55 // pred_fallthru
              _
            // Predicated region
            $region61: #{tpu_custom_call.1} parent=55 // pred_check
              _
            $region62: #{tpu_custom_call.1} parent=55 // pred_check_branch
              %586 = sbr.rel target = $region64
            $region63: #{tpu_custom_call.1} parent=55 // pred_region
              %s588 = sshrl.u32 %s575, 1
              // While loop
              $region65: #{tpu_custom_call.1} parent=63 // loop_pre_header
                _
              $region66: #{tpu_custom_call.1} parent=63 // loop_header
                %s590 = sphi 0, %s592
                %p591 = scmp.ge.s32.totalorder %s590, %s588
                %s595 = sphi 0, %s604
                %s596 = sphi %s568, %s607
                %s597 = sphi %s579, %s608
              $region67: #{tpu_custom_call.1} parent=63 // loop_header_branch
                %594 = sbr.rel (%p591) target = $region71
              $region68: #{tpu_custom_call.1} parent=63 // loop_body
                %v598 = vld [vmem:[%s596] sm:$0xff]
                %599 = vst [vmem:[%s597] sm:$0xff] %v598
                %v600 = vld [vmem:[%s596 + $0x8] sm:$0xff]
                %601 = vst [vmem:[%s597 + $0x8] sm:$0xff] %v600
                %s602 = sadd.s32 1, %s595
                %p603 = scmp.ge.s32.totalorder %s602, %s588
                %s604 = scalar_select %p603, 0, %s602
                %s605 = smul.u32 %s604, 16
                %s606 = smul.u32 %s604, 16
                %s607 = scalar_lea.vmem %s568, %s605 [#allocation7]
                %s608 = scalar_lea.vmem %s579, %s606
              $region69: #{tpu_custom_call.1} parent=63 // loop_footer
                %s592 = sadd.s32 %s590, 1
              $region70: #{tpu_custom_call.1} parent=63 // loop_footer_branch
                %589 = sbr.rel target = $region66
              $region71: #{tpu_custom_call.1} parent=63 // loop_exit
                _
              %s609 = sshrl.u32 %s575, 1
              %s610 = sand.u32 %s575, 1
              %s611 = smul.u32 %s609, 2
              %s612 = smul.u32 8, %s611
              %s613 = scalar_lea.vmem %s568, %s612 [#allocation7]
              %s614 = smul.u32 8, %s611
              %s615 = scalar_lea.vmem %s579, %s614
              // While loop
              $region72: #{tpu_custom_call.1} parent=63 // loop_pre_header
                _
              $region73: #{tpu_custom_call.1} parent=63 // loop_header
                %s617 = sphi 0, %s619
                %p618 = scmp.ge.s32.totalorder %s617, %s610
                %s622 = sphi 0, %s629
                %s623 = sphi %s613, %s632
                %s624 = sphi %s615, %s633
              $region74: #{tpu_custom_call.1} parent=63 // loop_header_branch
                %621 = sbr.rel (%p618) target = $region78
              $region75: #{tpu_custom_call.1} parent=63 // loop_body
                %v625 = vld [vmem:[%s623] sm:$0xff]
                %626 = vst [vmem:[%s624] sm:$0xff] %v625
                %s627 = sadd.s32 1, %s622
                %p628 = scmp.ge.s32.totalorder %s627, %s610
                %s629 = scalar_select %p628, 0, %s627
                %s630 = smul.u32 %s629, 8
                %s631 = smul.u32 %s629, 8
                %s632 = scalar_lea.vmem %s613, %s630 [#allocation7]
                %s633 = scalar_lea.vmem %s615, %s631
              $region76: #{tpu_custom_call.1} parent=63 // loop_footer
                %s619 = sadd.s32 %s617, 1
              $region77: #{tpu_custom_call.1} parent=63 // loop_footer_branch
                %616 = sbr.rel target = $region73
              $region78: #{tpu_custom_call.1} parent=63 // loop_exit
                _
            $region64: #{tpu_custom_call.1} parent=55 // pred_fallthru
              _
          $region56: #{tpu_custom_call.1} parent=51 // pred_fallthru
            _
          %684 = vnop
        $region52: #{tpu_custom_call.1} parent=39 // pred_fallthru
          _
      $region40: #{tpu_custom_call.1} parent=5 // pred_fallthru
        _
      %p685 = scmp.le.s32.totalorder 2, %s17
      // Predicated region
      $region101: #{tpu_custom_call.1} parent=5 // pred_check
        %p686 = pneg %p685
      $region102: #{tpu_custom_call.1} parent=5 // pred_check_branch
        %688 = sbr.rel (%p686) target = $region104
      $region103: #{tpu_custom_call.1} parent=5 // pred_region
        %s689 = ssub.s32 %s17, 2
        // Predicated region
        $region105: #{tpu_custom_call.1} parent=103 // pred_check
          %p690 = pneg %p156
        $region106: #{tpu_custom_call.1} parent=103 // pred_check_branch
          %692 = sbr.rel (%p690) target = $region108
        $region107: #{tpu_custom_call.1} parent=103 // pred_region
          %s693 = sand.u32 %s141, 1
          %s694 = sand.u32 %s141, 1
          %s695 = smul.addr %s694, 16
          %s696 = scalar_lea.vmem [#allocation7], %s695
        $region108: #{tpu_custom_call.1} parent=103 // pred_fallthru
          _
      $region104: #{tpu_custom_call.1} parent=5 // pred_fallthru
        _
    $region6: #{tpu_custom_call.1} parent=1 // loop_footer
      %s21 = sadd.s32 1, %s17
    $region7: #{tpu_custom_call.1} parent=1 // loop_footer_branch
      %16 = sbr.rel target = $region3
    $region8: #{tpu_custom_call.1} parent=1 // loop_exit
      _
    %697 = vsyncpa [#allocation4], 1
    %s698 = scalar_lea.sflag [#allocation4], 1
    %699 = vsyncpa %s698, 1
    %700 = vsyncpa [#allocation6], 1

</llo_original>
